<compile_context>
chip_gen: v5e
topology: v5e:2x2
jax: 0.10.0
libtpu: 0.0.40
codegen_flags: <defaults>
</compile_context>

<pallas_src>
import functools

import jax
import jax.numpy as jnp
from jax.experimental import pallas as pl
from jax.experimental.pallas import tpu as pltpu


# ----------------------------------------------------------------------------
# Fused Pallas kernel: all LSTM layers + linear head in one invocation.
# ----------------------------------------------------------------------------
def fused_classifier_lstm_kernel(*refs, T, B, lstm_hidden, lstm_relu,
                                 num_linear, lin_relu):
    """refs layout:
         x_ref (T*B-flattened batch-major input, shape (B*T, I)),
         then per LSTM layer: (wih (I,4H), whh (H,4H), bias (1,4H)),
         then per Linear:     (w (In,Out), bias (1,Out)),
         then out_ref (B, num_classes),
         then one VMEM scratch (T*B, H_l) per non-final LSTM layer.
    """
    n_lstm = len(lstm_hidden)
    idx = 0
    x_ref = refs[idx]; idx += 1
    lstm_refs = []
    for _ in range(n_lstm):
        lstm_refs.append((refs[idx], refs[idx + 1], refs[idx + 2]))
        idx += 3
    lin_refs = []
    for _ in range(num_linear):
        lin_refs.append((refs[idx], refs[idx + 1]))
        idx += 2
    out_ref = refs[idx]; idx += 1
    seq_scratch = refs[idx:]        # (n_lstm - 1) inter-layer VMEM buffers

    final_h = None
    for l in range(n_lstm):
        H = lstm_hidden[l]
        relu_out = lstm_relu[l]
        wih_ref, whh_ref, b_ref = lstm_refs[l]
        wih = wih_ref[...]
        whh = whh_ref[...]
        bias = b_ref[...]

        # ---- hoisted input projection: one matmul for the whole sequence ----
        if l == 0:
            # x rows are batch-major: row b*T + t == x[b, t, :]
            gin = jnp.dot(x_ref[...], wih,
                          preferred_element_type=jnp.float32) + bias  # (B*T, 4H)

            def gate_in(t, _g=gin):
                # gather rows {b*T + t} -> (B, 4H); B tiny so static slices+concat
                return jnp.concatenate(
                    [_g[b * T + t:b * T + t + 1, :] for b in range(B)], axis=0)
        else:
            prev = seq_scratch[l - 1][...]                    # (T*B, H_prev), time-major
            gin = jnp.dot(prev, wih,
                          preferred_element_type=jnp.float32) + bias  # (T*B, 4H)

            def gate_in(t, _g=gin):
                return _g[t * B:(t + 1) * B, :]               # (B, 4H)

        # ---- serial recurrence (fully unrolled, only h @ W_hh inside) ----
        h = jnp.zeros((B, H), jnp.float32)
        c = jnp.zeros((B, H), jnp.float32)
        last_layer = (l == n_lstm - 1)

        for t in range(T):
            gates = gate_in(t) + jnp.dot(h, whh,
                                         preferred_element_type=jnp.float32)
            # PyTorch gate order [i, f, g, o]
            i_g = jax.nn.sigmoid(gates[:, 0 * H:1 * H])
            f_g = jax.nn.sigmoid(gates[:, 1 * H:2 * H])
            g_g = jnp.tanh(gates[:, 2 * H:3 * H])
            o_g = jax.nn.sigmoid(gates[:, 3 * H:4 * H])
            c = f_g * c + i_g * g_g
            h = o_g * jnp.tanh(c)                             # carry raw h in recurrence
            h_out = jnp.maximum(h, 0.0) if relu_out else h    # ReLU only on emitted output
            if not last_layer:
                # time-major handoff buffer for the next LSTM layer
                seq_scratch[l][t * B:(t + 1) * B, :] = h_out
            elif t == T - 1:
                final_h = h_out                               # == h[:, -1, :] (batch_first)

    # TODO(synk): training-mode dropout not implemented (eval: F.dropout(training=False) is identity)
    y = final_h
    for i in range(num_linear):
        w_ref, b_ref = lin_refs[i]
        y = jnp.dot(y, w_ref[...], preferred_element_type=jnp.float32) + b_ref[...]
        if lin_relu:
            y = jnp.maximum(y, 0.0)
    out_ref[...] = y.astype(out_ref.dtype)


# ----------------------------------------------------------------------------
# Wrapper
# ----------------------------------------------------------------------------
def classifier_lstm_forward(params, cfg, input_seqs, training=False):
    """Mirrors ClassifierLSTM.forward. input_seqs: (B, T, I), batch_first."""
    B, T, I = input_seqs.shape
    # Contiguous metadata reshape only (no transpose / no extra HBM pass).
    x2d = input_seqs.astype(jnp.float32).reshape(B * T, I)

    # Flatten stacked LSTM layers across the num_rnn modules.
    flat_lstm, lstm_hidden, lstm_relu = [], [], []
    for i in range(cfg.num_rnn):
        layers = params["lstm"][i]
        hidden = cfg.rnn_io[i][1]
        for li, layer in enumerate(layers):
            flat_lstm.append(layer)
            lstm_hidden.append(hidden)
            # F.relu is applied to the *output* of each whole nn.LSTM, i.e. the
            # top stacked layer only; inner stacked layers feed raw h onward.
            lstm_relu.append(bool(cfg.activ) and li == len(layers) - 1)

    lin = params["lin"]
    out_dim = lin[-1][0].shape[1]

    kernel = functools.partial(
        fused_classifier_lstm_kernel,
        T=T, B=B,
        lstm_hidden=tuple(lstm_hidden),
        lstm_relu=tuple(lstm_relu),
        num_linear=cfg.num_linear,
        lin_relu=bool(cfg.activ),
    )

    flat_args = [x2d]
    for (w_ih_t, w_hh_t, b) in flat_lstm:
        flat_args += [w_ih_t, w_hh_t, b]
    for (w_t, b) in lin:
        flat_args += [w_t, b]

    # One VMEM handoff buffer per non-final LSTM layer (time-major (T*B, H)).
    scratch_shapes = [pltpu.VMEM((T * B, lstm_hidden[l]), jnp.float32)
                      for l in range(len(flat_lstm) - 1)]

    if cfg.dropout and training:
        pass  # TODO(synk): training-mode dropout not implemented (eval path is identity)

    return pl.pallas_call(
        kernel,
        out_shape=jax.ShapeDtypeStruct((B, out_dim), jnp.float32),
        scratch_shapes=scratch_shapes,
    )(*flat_args)


# ----------------------------------------------------------------------------
# Deterministic parameter construction + pure-JAX reference
# ----------------------------------------------------------------------------
class Cfg:
    pass


def build_cfg():
    cfg = Cfg()
    cfg.num_rnn = 2
    cfg.rnn_io = [(16, 32), (32, 32)]   # (input, hidden) per nn.LSTM
    cfg.num_layers = [1, 1]             # stacked layers inside each nn.LSTM
    cfg.seq_len = 8
    cfg.num_linear = 2
    cfg.linear_io = [(32, 32), (32, 8)]
    cfg.activ = True
    cfg.dropout = True                  # identity when training=False
    return cfg


def init_params(cfg, key):
    params = {"lstm": [], "lin": []}
    for i in range(cfg.num_rnn):
        in_dim, hidden = cfg.rnn_io[i]
        k = 1.0 / jnp.sqrt(hidden)
        layers = []
        layer_in = in_dim
        for _ in range(cfg.num_layers[i]):
            key, k1, k2, k3, k4 = jax.random.split(key, 5)
            w_ih = jax.random.uniform(k1, (4 * hidden, layer_in), jnp.float32, -k, k)
            w_hh = jax.random.uniform(k2, (4 * hidden, hidden), jnp.float32, -k, k)
            b_ih = jax.random.uniform(k3, (4 * hidden,), jnp.float32, -k, k)
            b_hh = jax.random.uniform(k4, (4 * hidden,), jnp.float32, -k, k)
            layers.append((w_ih.T, w_hh.T, (b_ih + b_hh)[None, :]))
            layer_in = hidden
        params["lstm"].append(layers)
    for i in range(cfg.num_linear):
        fan_in, fan_out = cfg.linear_io[i]
        k = 1.0 / jnp.sqrt(fan_in)
        key, k1, k2 = jax.random.split(key, 3)
        w = jax.random.uniform(k1, (fan_out, fan_in), jnp.float32, -k, k)
        b = jax.random.uniform(k2, (fan_out,), jnp.float32, -k, k)
        params["lin"].append((w.T, b[None, :]))
    return params


def reference_forward(params, cfg, input_seqs):
    """Pure-JAX reference (lax.scan LSTM) matching PyTorch semantics."""
    def one_lstm(x_tbf, w_ih_t, w_hh_t, b, hidden):
        B = x_tbf.shape[1]

        def step(carry, x_t):
            h, c = carry
            gates = x_t @ w_ih_t + h @ w_hh_t + b
            i_g = jax.nn.sigmoid(gates[:, :hidden])
            f_g = jax.nn.sigmoid(gates[:, hidden:2 * hidden])
            g_g = jnp.tanh(gates[:, 2 * hidden:3 * hidden])
            o_g = jax.nn.sigmoid(gates[:, 3 * hidden:])
            c = f_g * c + i_g * g_g
            h = o_g * jnp.tanh(c)
            return (h, c), h

        init = (jnp.zeros((B, hidden), jnp.float32),
                jnp.zeros((B, hidden), jnp.float32))
        _, hs = jax.lax.scan(step, init, x_tbf)
        return hs

    h = jnp.transpose(input_seqs, (1, 0, 2)).astype(jnp.float32)
    for i in range(cfg.num_rnn):
        hidden = cfg.rnn_io[i][1]
        for li, (w_ih_t, w_hh_t, b) in enumerate(params["lstm"][i]):
            h = one_lstm(h, w_ih_t, w_hh_t, b, hidden)
            if cfg.activ and li == len(params["lstm"][i]) - 1:
                h = jnp.maximum(h, 0.0)
    h_last = h[-1]
    for i in range(cfg.num_linear):
        w_t, b = params["lin"][i]
        h_last = h_last @ w_t + b
        if cfg.activ:
            h_last = jnp.maximum(h_last, 0.0)
    return h_last


# ----------------------------------------------------------------------------
if __name__ == "__main__":
    cfg = build_cfg()
    key = jax.random.PRNGKey(0)
    key, pkey, xkey = jax.random.split(key, 3)
    params = init_params(cfg, pkey)

    B, T, I = 2, cfg.seq_len, cfg.rnn_io[0][0]
    x = jax.random.normal(xkey, (B, T, I), jnp.float32)

    out = classifier_lstm_forward(params, cfg, x, training=False)
    out = jax.block_until_ready(out)

    ref = jax.block_until_ready(reference_forward(params, cfg, x))
    assert out.shape == (B, cfg.linear_io[-1][1])
    assert jnp.allclose(out, ref, rtol=2e-3, atol=2e-3), "mismatch vs JAX reference"

    print("KERNEL_OK")
</pallas_src>

<mosaic_0001>
module attributes {stable_mosaic.version = 11 : i64} {
  func.func @fused_classifier_lstm_kernel(%arg0: memref<16x16xf32, #tpu.memory_space<vmem>>, %arg1: memref<16x128xf32, #tpu.memory_space<vmem>>, %arg2: memref<32x128xf32, #tpu.memory_space<vmem>>, %arg3: memref<1x128xf32, #tpu.memory_space<vmem>>, %arg4: memref<32x128xf32, #tpu.memory_space<vmem>>, %arg5: memref<32x128xf32, #tpu.memory_space<vmem>>, %arg6: memref<1x128xf32, #tpu.memory_space<vmem>>, %arg7: memref<32x32xf32, #tpu.memory_space<vmem>>, %arg8: memref<1x32xf32, #tpu.memory_space<vmem>>, %arg9: memref<32x8xf32, #tpu.memory_space<vmem>>, %arg10: memref<1x8xf32, #tpu.memory_space<vmem>>, %arg11: memref<2x8xf32, #tpu.memory_space<vmem>>, %arg12: memref<16x32xf32, #tpu.memory_space<vmem>>) attributes {dimension_semantics = [], scalar_prefetch = 0 : i64, scratch_operands = 1 : i64, tpu.core_type = #tpu.core_type<tc>} {
    %c0 = arith.constant 0 : index
    %c0_0 = arith.constant 0 : index
    %0 = vector.load %arg1[%c0, %c0_0] : memref<16x128xf32, #tpu.memory_space<vmem>>, vector<16x128xf32>
    %c0_1 = arith.constant 0 : index
    %c0_2 = arith.constant 0 : index
    %1 = vector.load %arg2[%c0_1, %c0_2] : memref<32x128xf32, #tpu.memory_space<vmem>>, vector<32x128xf32>
    %c0_3 = arith.constant 0 : index
    %c0_4 = arith.constant 0 : index
    %2 = vector.load %arg3[%c0_3, %c0_4] : memref<1x128xf32, #tpu.memory_space<vmem>>, vector<1x128xf32>
    %c0_5 = arith.constant 0 : index
    %c0_6 = arith.constant 0 : index
    %3 = vector.load %arg0[%c0_5, %c0_6] : memref<16x16xf32, #tpu.memory_space<vmem>>, vector<16x16xf32>
    %cst = arith.constant dense<0.000000e+00> : vector<16x128xf32>
    %4 = tpu.matmul %3, %0, %cst {dimension_numbers = #tpu.dot_dimension_numbers<[1], [0], [0], [1], [0, 0, 1, 1], [], []>} : vector<16x16xf32>, vector<16x128xf32>, vector<16x128xf32> -> vector<16x128xf32>
    %5 = vector.broadcast %2 : vector<1x128xf32> to vector<16x128xf32>
    %6 = arith.addf %4, %5 : vector<16x128xf32>
    %cst_7 = arith.constant 0.000000e+00 : f32
    %7 = vector.broadcast %cst_7 : f32 to vector<2x32xf32>
    %cst_8 = arith.constant 0.000000e+00 : f32
    %8 = vector.broadcast %cst_8 : f32 to vector<2x32xf32>
    %9 = vector.extract_strided_slice %6 {offsets = [0, 0], sizes = [1, 128], strides = [1, 1]} : vector<16x128xf32> to vector<1x128xf32>
    %10 = vector.extract_strided_slice %6 {offsets = [8, 0], sizes = [1, 128], strides = [1, 1]} : vector<16x128xf32> to vector<1x128xf32>
    %11 = tpu.concatenate %9, %10 in 0 : vector<1x128xf32>, vector<1x128xf32> -> vector<2x128xf32>
    %cst_9 = arith.constant dense<0.000000e+00> : vector<2x128xf32>
    %12 = tpu.matmul %7, %1, %cst_9 {dimension_numbers = #tpu.dot_dimension_numbers<[1], [0], [0], [1], [0, 0, 1, 1], [], []>} : vector<2x32xf32>, vector<32x128xf32>, vector<2x128xf32> -> vector<2x128xf32>
    %13 = arith.addf %11, %12 : vector<2x128xf32>
    %14 = vector.extract_strided_slice %13 {offsets = [0, 0], sizes = [2, 32], strides = [1, 1]} : vector<2x128xf32> to vector<2x32xf32>
    %15 = arith.negf %14 : vector<2x32xf32>
    %16 = math.exp %15 : vector<2x32xf32>
    %cst_10 = arith.constant 1.000000e+00 : f32
    %17 = vector.broadcast %cst_10 : f32 to vector<2x32xf32>
    %18 = arith.addf %17, %16 : vector<2x32xf32>
    %19 = arith.divf %17, %18 : vector<2x32xf32>
    %20 = vector.extract_strided_slice %13 {offsets = [0, 32], sizes = [2, 32], strides = [1, 1]} : vector<2x128xf32> to vector<2x32xf32>
    %21 = arith.negf %20 : vector<2x32xf32>
    %22 = math.exp %21 : vector<2x32xf32>
    %cst_11 = arith.constant 1.000000e+00 : f32
    %23 = vector.broadcast %cst_11 : f32 to vector<2x32xf32>
    %24 = arith.addf %23, %22 : vector<2x32xf32>
    %25 = arith.divf %23, %24 : vector<2x32xf32>
    %26 = vector.extract_strided_slice %13 {offsets = [0, 64], sizes = [2, 32], strides = [1, 1]} : vector<2x128xf32> to vector<2x32xf32>
    %27 = math.tanh %26 : vector<2x32xf32>
    %28 = vector.extract_strided_slice %13 {offsets = [0, 96], sizes = [2, 32], strides = [1, 1]} : vector<2x128xf32> to vector<2x32xf32>
    %29 = arith.negf %28 : vector<2x32xf32>
    %30 = math.exp %29 : vector<2x32xf32>
    %cst_12 = arith.constant 1.000000e+00 : f32
    %31 = vector.broadcast %cst_12 : f32 to vector<2x32xf32>
    %32 = arith.addf %31, %30 : vector<2x32xf32>
    %33 = arith.divf %31, %32 : vector<2x32xf32>
    %34 = arith.mulf %25, %8 : vector<2x32xf32>
    %35 = arith.mulf %19, %27 : vector<2x32xf32>
    %36 = arith.addf %34, %35 : vector<2x32xf32>
    %37 = math.tanh %36 : vector<2x32xf32>
    %38 = arith.mulf %33, %37 : vector<2x32xf32>
    %cst_13 = arith.constant 0.000000e+00 : f32
    %39 = vector.broadcast %cst_13 : f32 to vector<2x32xf32>
    %40 = arith.maximumf %38, %39 : vector<2x32xf32>
    %c0_14 = arith.constant 0 : index
    %c0_15 = arith.constant 0 : index
    %41 = vector.load %arg12[%c0_14, %c0_15] : memref<16x32xf32, #tpu.memory_space<vmem>>, vector<2x32xf32>
    tpu.vector_store %arg12[%c0_14, %c0_15], %40 {strides = array<i32>} : memref<16x32xf32, #tpu.memory_space<vmem>>, vector<2x32xf32>,
    %42 = vector.extract_strided_slice %6 {offsets = [1, 0], sizes = [1, 128], strides = [1, 1]} : vector<16x128xf32> to vector<1x128xf32>
    %43 = vector.extract_strided_slice %6 {offsets = [9, 0], sizes = [1, 128], strides = [1, 1]} : vector<16x128xf32> to vector<1x128xf32>
    %44 = tpu.concatenate %42, %43 in 0 : vector<1x128xf32>, vector<1x128xf32> -> vector<2x128xf32>
    %cst_16 = arith.constant dense<0.000000e+00> : vector<2x128xf32>
    %45 = tpu.matmul %38, %1, %cst_16 {dimension_numbers = #tpu.dot_dimension_numbers<[1], [0], [0], [1], [0, 0, 1, 1], [], []>} : vector<2x32xf32>, vector<32x128xf32>, vector<2x128xf32> -> vector<2x128xf32>
    %46 = arith.addf %44, %45 : vector<2x128xf32>
    %47 = vector.extract_strided_slice %46 {offsets = [0, 0], sizes = [2, 32], strides = [1, 1]} : vector<2x128xf32> to vector<2x32xf32>
    %48 = arith.negf %47 : vector<2x32xf32>
    %49 = math.exp %48 : vector<2x32xf32>
    %cst_17 = arith.constant 1.000000e+00 : f32
    %50 = vector.broadcast %cst_17 : f32 to vector<2x32xf32>
    %51 = arith.addf %50, %49 : vector<2x32xf32>
    %52 = arith.divf %50, %51 : vector<2x32xf32>
    %53 = vector.extract_strided_slice %46 {offsets = [0, 32], sizes = [2, 32], strides = [1, 1]} : vector<2x128xf32> to vector<2x32xf32>
    %54 = arith.negf %53 : vector<2x32xf32>
    %55 = math.exp %54 : vector<2x32xf32>
    %cst_18 = arith.constant 1.000000e+00 : f32
    %56 = vector.broadcast %cst_18 : f32 to vector<2x32xf32>
    %57 = arith.addf %56, %55 : vector<2x32xf32>
    %58 = arith.divf %56, %57 : vector<2x32xf32>
    %59 = vector.extract_strided_slice %46 {offsets = [0, 64], sizes = [2, 32], strides = [1, 1]} : vector<2x128xf32> to vector<2x32xf32>
    %60 = math.tanh %59 : vector<2x32xf32>
    %61 = vector.extract_strided_slice %46 {offsets = [0, 96], sizes = [2, 32], strides = [1, 1]} : vector<2x128xf32> to vector<2x32xf32>
    %62 = arith.negf %61 : vector<2x32xf32>
    %63 = math.exp %62 : vector<2x32xf32>
    %cst_19 = arith.constant 1.000000e+00 : f32
    %64 = vector.broadcast %cst_19 : f32 to vector<2x32xf32>
    %65 = arith.addf %64, %63 : vector<2x32xf32>
    %66 = arith.divf %64, %65 : vector<2x32xf32>
    %67 = arith.mulf %58, %36 : vector<2x32xf32>
    %68 = arith.mulf %52, %60 : vector<2x32xf32>
    %69 = arith.addf %67, %68 : vector<2x32xf32>
    %70 = math.tanh %69 : vector<2x32xf32>
    %71 = arith.mulf %66, %70 : vector<2x32xf32>
    %cst_20 = arith.constant 0.000000e+00 : f32
    %72 = vector.broadcast %cst_20 : f32 to vector<2x32xf32>
    %73 = arith.maximumf %71, %72 : vector<2x32xf32>
    %c2 = arith.constant 2 : index
    %c0_21 = arith.constant 0 : index
    %74 = vector.load %arg12[%c2, %c0_21] : memref<16x32xf32, #tpu.memory_space<vmem>>, vector<2x32xf32>
    tpu.vector_store %arg12[%c2, %c0_21], %73 {strides = array<i32>} : memref<16x32xf32, #tpu.memory_space<vmem>>, vector<2x32xf32>,
    %75 = vector.extract_strided_slice %6 {offsets = [2, 0], sizes = [1, 128], strides = [1, 1]} : vector<16x128xf32> to vector<1x128xf32>
    %76 = vector.extract_strided_slice %6 {offsets = [10, 0], sizes = [1, 128], strides = [1, 1]} : vector<16x128xf32> to vector<1x128xf32>
    %77 = tpu.concatenate %75, %76 in 0 : vector<1x128xf32>, vector<1x128xf32> -> vector<2x128xf32>
    %cst_22 = arith.constant dense<0.000000e+00> : vector<2x128xf32>
    %78 = tpu.matmul %71, %1, %cst_22 {dimension_numbers = #tpu.dot_dimension_numbers<[1], [0], [0], [1], [0, 0, 1, 1], [], []>} : vector<2x32xf32>, vector<32x128xf32>, vector<2x128xf32> -> vector<2x128xf32>
    %79 = arith.addf %77, %78 : vector<2x128xf32>
    %80 = vector.extract_strided_slice %79 {offsets = [0, 0], sizes = [2, 32], strides = [1, 1]} : vector<2x128xf32> to vector<2x32xf32>
    %81 = arith.negf %80 : vector<2x32xf32>
    %82 = math.exp %81 : vector<2x32xf32>
    %cst_23 = arith.constant 1.000000e+00 : f32
    %83 = vector.broadcast %cst_23 : f32 to vector<2x32xf32>
    %84 = arith.addf %83, %82 : vector<2x32xf32>
    %85 = arith.divf %83, %84 : vector<2x32xf32>
    %86 = vector.extract_strided_slice %79 {offsets = [0, 32], sizes = [2, 32], strides = [1, 1]} : vector<2x128xf32> to vector<2x32xf32>
    %87 = arith.negf %86 : vector<2x32xf32>
    %88 = math.exp %87 : vector<2x32xf32>
    %cst_24 = arith.constant 1.000000e+00 : f32
    %89 = vector.broadcast %cst_24 : f32 to vector<2x32xf32>
    %90 = arith.addf %89, %88 : vector<2x32xf32>
    %91 = arith.divf %89, %90 : vector<2x32xf32>
    %92 = vector.extract_strided_slice %79 {offsets = [0, 64], sizes = [2, 32], strides = [1, 1]} : vector<2x128xf32> to vector<2x32xf32>
    %93 = math.tanh %92 : vector<2x32xf32>
    %94 = vector.extract_strided_slice %79 {offsets = [0, 96], sizes = [2, 32], strides = [1, 1]} : vector<2x128xf32> to vector<2x32xf32>
    %95 = arith.negf %94 : vector<2x32xf32>
    %96 = math.exp %95 : vector<2x32xf32>
    %cst_25 = arith.constant 1.000000e+00 : f32
    %97 = vector.broadcast %cst_25 : f32 to vector<2x32xf32>
    %98 = arith.addf %97, %96 : vector<2x32xf32>
    %99 = arith.divf %97, %98 : vector<2x32xf32>
    %100 = arith.mulf %91, %69 : vector<2x32xf32>
    %101 = arith.mulf %85, %93 : vector<2x32xf32>
    %102 = arith.addf %100, %101 : vector<2x32xf32>
    %103 = math.tanh %102 : vector<2x32xf32>
    %104 = arith.mulf %99, %103 : vector<2x32xf32>
    %cst_26 = arith.constant 0.000000e+00 : f32
    %105 = vector.broadcast %cst_26 : f32 to vector<2x32xf32>
    %106 = arith.maximumf %104, %105 : vector<2x32xf32>
    %c4 = arith.constant 4 : index
    %c0_27 = arith.constant 0 : index
    %107 = vector.load %arg12[%c4, %c0_27] : memref<16x32xf32, #tpu.memory_space<vmem>>, vector<2x32xf32>
    tpu.vector_store %arg12[%c4, %c0_27], %106 {strides = array<i32>} : memref<16x32xf32, #tpu.memory_space<vmem>>, vector<2x32xf32>,
    %108 = vector.extract_strided_slice %6 {offsets = [3, 0], sizes = [1, 128], strides = [1, 1]} : vector<16x128xf32> to vector<1x128xf32>
    %109 = vector.extract_strided_slice %6 {offsets = [11, 0], sizes = [1, 128], strides = [1, 1]} : vector<16x128xf32> to vector<1x128xf32>
    %110 = tpu.concatenate %108, %109 in 0 : vector<1x128xf32>, vector<1x128xf32> -> vector<2x128xf32>
    %cst_28 = arith.constant dense<0.000000e+00> : vector<2x128xf32>
    %111 = tpu.matmul %104, %1, %cst_28 {dimension_numbers = #tpu.dot_dimension_numbers<[1], [0], [0], [1], [0, 0, 1, 1], [], []>} : vector<2x32xf32>, vector<32x128xf32>, vector<2x128xf32> -> vector<2x128xf32>
    %112 = arith.addf %110, %111 : vector<2x128xf32>
    %113 = vector.extract_strided_slice %112 {offsets = [0, 0], sizes = [2, 32], strides = [1, 1]} : vector<2x128xf32> to vector<2x32xf32>
    %114 = arith.negf %113 : vector<2x32xf32>
    %115 = math.exp %114 : vector<2x32xf32>
    %cst_29 = arith.constant 1.000000e+00 : f32
    %116 = vector.broadcast %cst_29 : f32 to vector<2x32xf32>
    %117 = arith.addf %116, %115 : vector<2x32xf32>
    %118 = arith.divf %116, %117 : vector<2x32xf32>
    %119 = vector.extract_strided_slice %112 {offsets = [0, 32], sizes = [2, 32], strides = [1, 1]} : vector<2x128xf32> to vector<2x32xf32>
    %120 = arith.negf %119 : vector<2x32xf32>
    %121 = math.exp %120 : vector<2x32xf32>
    %cst_30 = arith.constant 1.000000e+00 : f32
    %122 = vector.broadcast %cst_30 : f32 to vector<2x32xf32>
    %123 = arith.addf %122, %121 : vector<2x32xf32>
    %124 = arith.divf %122, %123 : vector<2x32xf32>
    %125 = vector.extract_strided_slice %112 {offsets = [0, 64], sizes = [2, 32], strides = [1, 1]} : vector<2x128xf32> to vector<2x32xf32>
    %126 = math.tanh %125 : vector<2x32xf32>
    %127 = vector.extract_strided_slice %112 {offsets = [0, 96], sizes = [2, 32], strides = [1, 1]} : vector<2x128xf32> to vector<2x32xf32>
    %128 = arith.negf %127 : vector<2x32xf32>
    %129 = math.exp %128 : vector<2x32xf32>
    %cst_31 = arith.constant 1.000000e+00 : f32
    %130 = vector.broadcast %cst_31 : f32 to vector<2x32xf32>
    %131 = arith.addf %130, %129 : vector<2x32xf32>
    %132 = arith.divf %130, %131 : vector<2x32xf32>
    %133 = arith.mulf %124, %102 : vector<2x32xf32>
    %134 = arith.mulf %118, %126 : vector<2x32xf32>
    %135 = arith.addf %133, %134 : vector<2x32xf32>
    %136 = math.tanh %135 : vector<2x32xf32>
    %137 = arith.mulf %132, %136 : vector<2x32xf32>
    %cst_32 = arith.constant 0.000000e+00 : f32
    %138 = vector.broadcast %cst_32 : f32 to vector<2x32xf32>
    %139 = arith.maximumf %137, %138 : vector<2x32xf32>
    %c6 = arith.constant 6 : index
    %c0_33 = arith.constant 0 : index
    %140 = vector.load %arg12[%c6, %c0_33] : memref<16x32xf32, #tpu.memory_space<vmem>>, vector<2x32xf32>
    tpu.vector_store %arg12[%c6, %c0_33], %139 {strides = array<i32>} : memref<16x32xf32, #tpu.memory_space<vmem>>, vector<2x32xf32>,
    %141 = vector.extract_strided_slice %6 {offsets = [4, 0], sizes = [1, 128], strides = [1, 1]} : vector<16x128xf32> to vector<1x128xf32>
    %142 = vector.extract_strided_slice %6 {offsets = [12, 0], sizes = [1, 128], strides = [1, 1]} : vector<16x128xf32> to vector<1x128xf32>
    %143 = tpu.concatenate %141, %142 in 0 : vector<1x128xf32>, vector<1x128xf32> -> vector<2x128xf32>
    %cst_34 = arith.constant dense<0.000000e+00> : vector<2x128xf32>
    %144 = tpu.matmul %137, %1, %cst_34 {dimension_numbers = #tpu.dot_dimension_numbers<[1], [0], [0], [1], [0, 0, 1, 1], [], []>} : vector<2x32xf32>, vector<32x128xf32>, vector<2x128xf32> -> vector<2x128xf32>
    %145 = arith.addf %143, %144 : vector<2x128xf32>
    %146 = vector.extract_strided_slice %145 {offsets = [0, 0], sizes = [2, 32], strides = [1, 1]} : vector<2x128xf32> to vector<2x32xf32>
    %147 = arith.negf %146 : vector<2x32xf32>
    %148 = math.exp %147 : vector<2x32xf32>
    %cst_35 = arith.constant 1.000000e+00 : f32
    %149 = vector.broadcast %cst_35 : f32 to vector<2x32xf32>
    %150 = arith.addf %149, %148 : vector<2x32xf32>
    %151 = arith.divf %149, %150 : vector<2x32xf32>
    %152 = vector.extract_strided_slice %145 {offsets = [0, 32], sizes = [2, 32], strides = [1, 1]} : vector<2x128xf32> to vector<2x32xf32>
    %153 = arith.negf %152 : vector<2x32xf32>
    %154 = math.exp %153 : vector<2x32xf32>
    %cst_36 = arith.constant 1.000000e+00 : f32
    %155 = vector.broadcast %cst_36 : f32 to vector<2x32xf32>
    %156 = arith.addf %155, %154 : vector<2x32xf32>
    %157 = arith.divf %155, %156 : vector<2x32xf32>
    %158 = vector.extract_strided_slice %145 {offsets = [0, 64], sizes = [2, 32], strides = [1, 1]} : vector<2x128xf32> to vector<2x32xf32>
    %159 = math.tanh %158 : vector<2x32xf32>
    %160 = vector.extract_strided_slice %145 {offsets = [0, 96], sizes = [2, 32], strides = [1, 1]} : vector<2x128xf32> to vector<2x32xf32>
    %161 = arith.negf %160 : vector<2x32xf32>
    %162 = math.exp %161 : vector<2x32xf32>
    %cst_37 = arith.constant 1.000000e+00 : f32
    %163 = vector.broadcast %cst_37 : f32 to vector<2x32xf32>
    %164 = arith.addf %163, %162 : vector<2x32xf32>
    %165 = arith.divf %163, %164 : vector<2x32xf32>
    %166 = arith.mulf %157, %135 : vector<2x32xf32>
    %167 = arith.mulf %151, %159 : vector<2x32xf32>
    %168 = arith.addf %166, %167 : vector<2x32xf32>
    %169 = math.tanh %168 : vector<2x32xf32>
    %170 = arith.mulf %165, %169 : vector<2x32xf32>
    %cst_38 = arith.constant 0.000000e+00 : f32
    %171 = vector.broadcast %cst_38 : f32 to vector<2x32xf32>
    %172 = arith.maximumf %170, %171 : vector<2x32xf32>
    %c8 = arith.constant 8 : index
    %c0_39 = arith.constant 0 : index
    %173 = vector.load %arg12[%c8, %c0_39] : memref<16x32xf32, #tpu.memory_space<vmem>>, vector<2x32xf32>
    tpu.vector_store %arg12[%c8, %c0_39], %172 {strides = array<i32>} : memref<16x32xf32, #tpu.memory_space<vmem>>, vector<2x32xf32>,
    %174 = vector.extract_strided_slice %6 {offsets = [5, 0], sizes = [1, 128], strides = [1, 1]} : vector<16x128xf32> to vector<1x128xf32>
    %175 = vector.extract_strided_slice %6 {offsets = [13, 0], sizes = [1, 128], strides = [1, 1]} : vector<16x128xf32> to vector<1x128xf32>
    %176 = tpu.concatenate %174, %175 in 0 : vector<1x128xf32>, vector<1x128xf32> -> vector<2x128xf32>
    %cst_40 = arith.constant dense<0.000000e+00> : vector<2x128xf32>
    %177 = tpu.matmul %170, %1, %cst_40 {dimension_numbers = #tpu.dot_dimension_numbers<[1], [0], [0], [1], [0, 0, 1, 1], [], []>} : vector<2x32xf32>, vector<32x128xf32>, vector<2x128xf32> -> vector<2x128xf32>
    %178 = arith.addf %176, %177 : vector<2x128xf32>
    %179 = vector.extract_strided_slice %178 {offsets = [0, 0], sizes = [2, 32], strides = [1, 1]} : vector<2x128xf32> to vector<2x32xf32>
    %180 = arith.negf %179 : vector<2x32xf32>
    %181 = math.exp %180 : vector<2x32xf32>
    %cst_41 = arith.constant 1.000000e+00 : f32
    %182 = vector.broadcast %cst_41 : f32 to vector<2x32xf32>
    %183 = arith.addf %182, %181 : vector<2x32xf32>
    %184 = arith.divf %182, %183 : vector<2x32xf32>
    %185 = vector.extract_strided_slice %178 {offsets = [0, 32], sizes = [2, 32], strides = [1, 1]} : vector<2x128xf32> to vector<2x32xf32>
    %186 = arith.negf %185 : vector<2x32xf32>
    %187 = math.exp %186 : vector<2x32xf32>
    %cst_42 = arith.constant 1.000000e+00 : f32
    %188 = vector.broadcast %cst_42 : f32 to vector<2x32xf32>
    %189 = arith.addf %188, %187 : vector<2x32xf32>
    %190 = arith.divf %188, %189 : vector<2x32xf32>
    %191 = vector.extract_strided_slice %178 {offsets = [0, 64], sizes = [2, 32], strides = [1, 1]} : vector<2x128xf32> to vector<2x32xf32>
    %192 = math.tanh %191 : vector<2x32xf32>
    %193 = vector.extract_strided_slice %178 {offsets = [0, 96], sizes = [2, 32], strides = [1, 1]} : vector<2x128xf32> to vector<2x32xf32>
    %194 = arith.negf %193 : vector<2x32xf32>
    %195 = math.exp %194 : vector<2x32xf32>
    %cst_43 = arith.constant 1.000000e+00 : f32
    %196 = vector.broadcast %cst_43 : f32 to vector<2x32xf32>
    %197 = arith.addf %196, %195 : vector<2x32xf32>
    %198 = arith.divf %196, %197 : vector<2x32xf32>
    %199 = arith.mulf %190, %168 : vector<2x32xf32>
    %200 = arith.mulf %184, %192 : vector<2x32xf32>
    %201 = arith.addf %199, %200 : vector<2x32xf32>
    %202 = math.tanh %201 : vector<2x32xf32>
    %203 = arith.mulf %198, %202 : vector<2x32xf32>
    %cst_44 = arith.constant 0.000000e+00 : f32
    %204 = vector.broadcast %cst_44 : f32 to vector<2x32xf32>
    %205 = arith.maximumf %203, %204 : vector<2x32xf32>
    %c10 = arith.constant 10 : index
    %c0_45 = arith.constant 0 : index
    %206 = vector.load %arg12[%c10, %c0_45] : memref<16x32xf32, #tpu.memory_space<vmem>>, vector<2x32xf32>
    tpu.vector_store %arg12[%c10, %c0_45], %205 {strides = array<i32>} : memref<16x32xf32, #tpu.memory_space<vmem>>, vector<2x32xf32>,
    %207 = vector.extract_strided_slice %6 {offsets = [6, 0], sizes = [1, 128], strides = [1, 1]} : vector<16x128xf32> to vector<1x128xf32>
    %208 = vector.extract_strided_slice %6 {offsets = [14, 0], sizes = [1, 128], strides = [1, 1]} : vector<16x128xf32> to vector<1x128xf32>
    %209 = tpu.concatenate %207, %208 in 0 : vector<1x128xf32>, vector<1x128xf32> -> vector<2x128xf32>
    %cst_46 = arith.constant dense<0.000000e+00> : vector<2x128xf32>
    %210 = tpu.matmul %203, %1, %cst_46 {dimension_numbers = #tpu.dot_dimension_numbers<[1], [0], [0], [1], [0, 0, 1, 1], [], []>} : vector<2x32xf32>, vector<32x128xf32>, vector<2x128xf32> -> vector<2x128xf32>
    %211 = arith.addf %209, %210 : vector<2x128xf32>
    %212 = vector.extract_strided_slice %211 {offsets = [0, 0], sizes = [2, 32], strides = [1, 1]} : vector<2x128xf32> to vector<2x32xf32>
    %213 = arith.negf %212 : vector<2x32xf32>
    %214 = math.exp %213 : vector<2x32xf32>
    %cst_47 = arith.constant 1.000000e+00 : f32
    %215 = vector.broadcast %cst_47 : f32 to vector<2x32xf32>
    %216 = arith.addf %215, %214 : vector<2x32xf32>
    %217 = arith.divf %215, %216 : vector<2x32xf32>
    %218 = vector.extract_strided_slice %211 {offsets = [0, 32], sizes = [2, 32], strides = [1, 1]} : vector<2x128xf32> to vector<2x32xf32>
    %219 = arith.negf %218 : vector<2x32xf32>
    %220 = math.exp %219 : vector<2x32xf32>
    %cst_48 = arith.constant 1.000000e+00 : f32
    %221 = vector.broadcast %cst_48 : f32 to vector<2x32xf32>
    %222 = arith.addf %221, %220 : vector<2x32xf32>
    %223 = arith.divf %221, %222 : vector<2x32xf32>
    %224 = vector.extract_strided_slice %211 {offsets = [0, 64], sizes = [2, 32], strides = [1, 1]} : vector<2x128xf32> to vector<2x32xf32>
    %225 = math.tanh %224 : vector<2x32xf32>
    %226 = vector.extract_strided_slice %211 {offsets = [0, 96], sizes = [2, 32], strides = [1, 1]} : vector<2x128xf32> to vector<2x32xf32>
    %227 = arith.negf %226 : vector<2x32xf32>
    %228 = math.exp %227 : vector<2x32xf32>
    %cst_49 = arith.constant 1.000000e+00 : f32
    %229 = vector.broadcast %cst_49 : f32 to vector<2x32xf32>
    %230 = arith.addf %229, %228 : vector<2x32xf32>
    %231 = arith.divf %229, %230 : vector<2x32xf32>
    %232 = arith.mulf %223, %201 : vector<2x32xf32>
    %233 = arith.mulf %217, %225 : vector<2x32xf32>
    %234 = arith.addf %232, %233 : vector<2x32xf32>
    %235 = math.tanh %234 : vector<2x32xf32>
    %236 = arith.mulf %231, %235 : vector<2x32xf32>
    %cst_50 = arith.constant 0.000000e+00 : f32
    %237 = vector.broadcast %cst_50 : f32 to vector<2x32xf32>
    %238 = arith.maximumf %236, %237 : vector<2x32xf32>
    %c12 = arith.constant 12 : index
    %c0_51 = arith.constant 0 : index
    %239 = vector.load %arg12[%c12, %c0_51] : memref<16x32xf32, #tpu.memory_space<vmem>>, vector<2x32xf32>
    tpu.vector_store %arg12[%c12, %c0_51], %238 {strides = array<i32>} : memref<16x32xf32, #tpu.memory_space<vmem>>, vector<2x32xf32>,
    %240 = vector.extract_strided_slice %6 {offsets = [7, 0], sizes = [1, 128], strides = [1, 1]} : vector<16x128xf32> to vector<1x128xf32>
    %241 = vector.extract_strided_slice %6 {offsets = [15, 0], sizes = [1, 128], strides = [1, 1]} : vector<16x128xf32> to vector<1x128xf32>
    %242 = tpu.concatenate %240, %241 in 0 : vector<1x128xf32>, vector<1x128xf32> -> vector<2x128xf32>
    %cst_52 = arith.constant dense<0.000000e+00> : vector<2x128xf32>
    %243 = tpu.matmul %236, %1, %cst_52 {dimension_numbers = #tpu.dot_dimension_numbers<[1], [0], [0], [1], [0, 0, 1, 1], [], []>} : vector<2x32xf32>, vector<32x128xf32>, vector<2x128xf32> -> vector<2x128xf32>
    %244 = arith.addf %242, %243 : vector<2x128xf32>
    %245 = vector.extract_strided_slice %244 {offsets = [0, 0], sizes = [2, 32], strides = [1, 1]} : vector<2x128xf32> to vector<2x32xf32>
    %246 = arith.negf %245 : vector<2x32xf32>
    %247 = math.exp %246 : vector<2x32xf32>
    %cst_53 = arith.constant 1.000000e+00 : f32
    %248 = vector.broadcast %cst_53 : f32 to vector<2x32xf32>
    %249 = arith.addf %248, %247 : vector<2x32xf32>
    %250 = arith.divf %248, %249 : vector<2x32xf32>
    %251 = vector.extract_strided_slice %244 {offsets = [0, 32], sizes = [2, 32], strides = [1, 1]} : vector<2x128xf32> to vector<2x32xf32>
    %252 = arith.negf %251 : vector<2x32xf32>
    %253 = math.exp %252 : vector<2x32xf32>
    %cst_54 = arith.constant 1.000000e+00 : f32
    %254 = vector.broadcast %cst_54 : f32 to vector<2x32xf32>
    %255 = arith.addf %254, %253 : vector<2x32xf32>
    %256 = arith.divf %254, %255 : vector<2x32xf32>
    %257 = vector.extract_strided_slice %244 {offsets = [0, 64], sizes = [2, 32], strides = [1, 1]} : vector<2x128xf32> to vector<2x32xf32>
    %258 = math.tanh %257 : vector<2x32xf32>
    %259 = vector.extract_strided_slice %244 {offsets = [0, 96], sizes = [2, 32], strides = [1, 1]} : vector<2x128xf32> to vector<2x32xf32>
    %260 = arith.negf %259 : vector<2x32xf32>
    %261 = math.exp %260 : vector<2x32xf32>
    %cst_55 = arith.constant 1.000000e+00 : f32
    %262 = vector.broadcast %cst_55 : f32 to vector<2x32xf32>
    %263 = arith.addf %262, %261 : vector<2x32xf32>
    %264 = arith.divf %262, %263 : vector<2x32xf32>
    %265 = arith.mulf %256, %234 : vector<2x32xf32>
    %266 = arith.mulf %250, %258 : vector<2x32xf32>
    %267 = arith.addf %265, %266 : vector<2x32xf32>
    %268 = math.tanh %267 : vector<2x32xf32>
    %269 = arith.mulf %264, %268 : vector<2x32xf32>
    %cst_56 = arith.constant 0.000000e+00 : f32
    %270 = vector.broadcast %cst_56 : f32 to vector<2x32xf32>
    %271 = arith.maximumf %269, %270 : vector<2x32xf32>
    %c14 = arith.constant 14 : index
    %c0_57 = arith.constant 0 : index
    %272 = vector.load %arg12[%c14, %c0_57] : memref<16x32xf32, #tpu.memory_space<vmem>>, vector<2x32xf32>
    tpu.vector_store %arg12[%c14, %c0_57], %271 {strides = array<i32>} : memref<16x32xf32, #tpu.memory_space<vmem>>, vector<2x32xf32>,
    %c0_58 = arith.constant 0 : index
    %c0_59 = arith.constant 0 : index
    %273 = vector.load %arg4[%c0_58, %c0_59] : memref<32x128xf32, #tpu.memory_space<vmem>>, vector<32x128xf32>
    %c0_60 = arith.constant 0 : index
    %c0_61 = arith.constant 0 : index
    %274 = vector.load %arg5[%c0_60, %c0_61] : memref<32x128xf32, #tpu.memory_space<vmem>>, vector<32x128xf32>
    %c0_62 = arith.constant 0 : index
    %c0_63 = arith.constant 0 : index
    %275 = vector.load %arg6[%c0_62, %c0_63] : memref<1x128xf32, #tpu.memory_space<vmem>>, vector<1x128xf32>
    %c0_64 = arith.constant 0 : index
    %c0_65 = arith.constant 0 : index
    %276 = vector.load %arg12[%c0_64, %c0_65] : memref<16x32xf32, #tpu.memory_space<vmem>>, vector<16x32xf32>
    %cst_66 = arith.constant dense<0.000000e+00> : vector<16x128xf32>
    %277 = tpu.matmul %276, %273, %cst_66 {dimension_numbers = #tpu.dot_dimension_numbers<[1], [0], [0], [1], [0, 0, 1, 1], [], []>} : vector<16x32xf32>, vector<32x128xf32>, vector<16x128xf32> -> vector<16x128xf32>
    %278 = vector.broadcast %275 : vector<1x128xf32> to vector<16x128xf32>
    %279 = arith.addf %277, %278 : vector<16x128xf32>
    %cst_67 = arith.constant 0.000000e+00 : f32
    %280 = vector.broadcast %cst_67 : f32 to vector<2x32xf32>
    %cst_68 = arith.constant 0.000000e+00 : f32
    %281 = vector.broadcast %cst_68 : f32 to vector<2x32xf32>
    %282 = vector.extract_strided_slice %279 {offsets = [0, 0], sizes = [2, 128], strides = [1, 1]} : vector<16x128xf32> to vector<2x128xf32>
    %cst_69 = arith.constant dense<0.000000e+00> : vector<2x128xf32>
    %283 = tpu.matmul %280, %274, %cst_69 {dimension_numbers = #tpu.dot_dimension_numbers<[1], [0], [0], [1], [0, 0, 1, 1], [], []>} : vector<2x32xf32>, vector<32x128xf32>, vector<2x128xf32> -> vector<2x128xf32>
    %284 = arith.addf %282, %283 : vector<2x128xf32>
    %285 = vector.extract_strided_slice %284 {offsets = [0, 0], sizes = [2, 32], strides = [1, 1]} : vector<2x128xf32> to vector<2x32xf32>
    %286 = arith.negf %285 : vector<2x32xf32>
    %287 = math.exp %286 : vector<2x32xf32>
    %cst_70 = arith.constant 1.000000e+00 : f32
    %288 = vector.broadcast %cst_70 : f32 to vector<2x32xf32>
    %289 = arith.addf %288, %287 : vector<2x32xf32>
    %290 = arith.divf %288, %289 : vector<2x32xf32>
    %291 = vector.extract_strided_slice %284 {offsets = [0, 32], sizes = [2, 32], strides = [1, 1]} : vector<2x128xf32> to vector<2x32xf32>
    %292 = arith.negf %291 : vector<2x32xf32>
    %293 = math.exp %292 : vector<2x32xf32>
    %cst_71 = arith.constant 1.000000e+00 : f32
    %294 = vector.broadcast %cst_71 : f32 to vector<2x32xf32>
    %295 = arith.addf %294, %293 : vector<2x32xf32>
    %296 = arith.divf %294, %295 : vector<2x32xf32>
    %297 = vector.extract_strided_slice %284 {offsets = [0, 64], sizes = [2, 32], strides = [1, 1]} : vector<2x128xf32> to vector<2x32xf32>
    %298 = math.tanh %297 : vector<2x32xf32>
    %299 = vector.extract_strided_slice %284 {offsets = [0, 96], sizes = [2, 32], strides = [1, 1]} : vector<2x128xf32> to vector<2x32xf32>
    %300 = arith.negf %299 : vector<2x32xf32>
    %301 = math.exp %300 : vector<2x32xf32>
    %cst_72 = arith.constant 1.000000e+00 : f32
    %302 = vector.broadcast %cst_72 : f32 to vector<2x32xf32>
    %303 = arith.addf %302, %301 : vector<2x32xf32>
    %304 = arith.divf %302, %303 : vector<2x32xf32>
    %305 = arith.mulf %296, %281 : vector<2x32xf32>
    %306 = arith.mulf %290, %298 : vector<2x32xf32>
    %307 = arith.addf %305, %306 : vector<2x32xf32>
    %308 = math.tanh %307 : vector<2x32xf32>
    %309 = arith.mulf %304, %308 : vector<2x32xf32>
    %310 = vector.extract_strided_slice %279 {offsets = [2, 0], sizes = [2, 128], strides = [1, 1]} : vector<16x128xf32> to vector<2x128xf32>
    %cst_73 = arith.constant dense<0.000000e+00> : vector<2x128xf32>
    %311 = tpu.matmul %309, %274, %cst_73 {dimension_numbers = #tpu.dot_dimension_numbers<[1], [0], [0], [1], [0, 0, 1, 1], [], []>} : vector<2x32xf32>, vector<32x128xf32>, vector<2x128xf32> -> vector<2x128xf32>
    %312 = arith.addf %310, %311 : vector<2x128xf32>
    %313 = vector.extract_strided_slice %312 {offsets = [0, 0], sizes = [2, 32], strides = [1, 1]} : vector<2x128xf32> to vector<2x32xf32>
    %314 = arith.negf %313 : vector<2x32xf32>
    %315 = math.exp %314 : vector<2x32xf32>
    %cst_74 = arith.constant 1.000000e+00 : f32
    %316 = vector.broadcast %cst_74 : f32 to vector<2x32xf32>
    %317 = arith.addf %316, %315 : vector<2x32xf32>
    %318 = arith.divf %316, %317 : vector<2x32xf32>
    %319 = vector.extract_strided_slice %312 {offsets = [0, 32], sizes = [2, 32], strides = [1, 1]} : vector<2x128xf32> to vector<2x32xf32>
    %320 = arith.negf %319 : vector<2x32xf32>
    %321 = math.exp %320 : vector<2x32xf32>
    %cst_75 = arith.constant 1.000000e+00 : f32
    %322 = vector.broadcast %cst_75 : f32 to vector<2x32xf32>
    %323 = arith.addf %322, %321 : vector<2x32xf32>
    %324 = arith.divf %322, %323 : vector<2x32xf32>
    %325 = vector.extract_strided_slice %312 {offsets = [0, 64], sizes = [2, 32], strides = [1, 1]} : vector<2x128xf32> to vector<2x32xf32>
    %326 = math.tanh %325 : vector<2x32xf32>
    %327 = vector.extract_strided_slice %312 {offsets = [0, 96], sizes = [2, 32], strides = [1, 1]} : vector<2x128xf32> to vector<2x32xf32>
    %328 = arith.negf %327 : vector<2x32xf32>
    %329 = math.exp %328 : vector<2x32xf32>
    %cst_76 = arith.constant 1.000000e+00 : f32
    %330 = vector.broadcast %cst_76 : f32 to vector<2x32xf32>
    %331 = arith.addf %330, %329 : vector<2x32xf32>
    %332 = arith.divf %330, %331 : vector<2x32xf32>
    %333 = arith.mulf %324, %307 : vector<2x32xf32>
    %334 = arith.mulf %318, %326 : vector<2x32xf32>
    %335 = arith.addf %333, %334 : vector<2x32xf32>
    %336 = math.tanh %335 : vector<2x32xf32>
    %337 = arith.mulf %332, %336 : vector<2x32xf32>
    %338 = vector.extract_strided_slice %279 {offsets = [4, 0], sizes = [2, 128], strides = [1, 1]} : vector<16x128xf32> to vector<2x128xf32>
    %cst_77 = arith.constant dense<0.000000e+00> : vector<2x128xf32>
    %339 = tpu.matmul %337, %274, %cst_77 {dimension_numbers = #tpu.dot_dimension_numbers<[1], [0], [0], [1], [0, 0, 1, 1], [], []>} : vector<2x32xf32>, vector<32x128xf32>, vector<2x128xf32> -> vector<2x128xf32>
    %340 = arith.addf %338, %339 : vector<2x128xf32>
    %341 = vector.extract_strided_slice %340 {offsets = [0, 0], sizes = [2, 32], strides = [1, 1]} : vector<2x128xf32> to vector<2x32xf32>
    %342 = arith.negf %341 : vector<2x32xf32>
    %343 = math.exp %342 : vector<2x32xf32>
    %cst_78 = arith.constant 1.000000e+00 : f32
    %344 = vector.broadcast %cst_78 : f32 to vector<2x32xf32>
    %345 = arith.addf %344, %343 : vector<2x32xf32>
    %346 = arith.divf %344, %345 : vector<2x32xf32>
    %347 = vector.extract_strided_slice %340 {offsets = [0, 32], sizes = [2, 32], strides = [1, 1]} : vector<2x128xf32> to vector<2x32xf32>
    %348 = arith.negf %347 : vector<2x32xf32>
    %349 = math.exp %348 : vector<2x32xf32>
    %cst_79 = arith.constant 1.000000e+00 : f32
    %350 = vector.broadcast %cst_79 : f32 to vector<2x32xf32>
    %351 = arith.addf %350, %349 : vector<2x32xf32>
    %352 = arith.divf %350, %351 : vector<2x32xf32>
    %353 = vector.extract_strided_slice %340 {offsets = [0, 64], sizes = [2, 32], strides = [1, 1]} : vector<2x128xf32> to vector<2x32xf32>
    %354 = math.tanh %353 : vector<2x32xf32>
    %355 = vector.extract_strided_slice %340 {offsets = [0, 96], sizes = [2, 32], strides = [1, 1]} : vector<2x128xf32> to vector<2x32xf32>
    %356 = arith.negf %355 : vector<2x32xf32>
    %357 = math.exp %356 : vector<2x32xf32>
    %cst_80 = arith.constant 1.000000e+00 : f32
    %358 = vector.broadcast %cst_80 : f32 to vector<2x32xf32>
    %359 = arith.addf %358, %357 : vector<2x32xf32>
    %360 = arith.divf %358, %359 : vector<2x32xf32>
    %361 = arith.mulf %352, %335 : vector<2x32xf32>
    %362 = arith.mulf %346, %354 : vector<2x32xf32>
    %363 = arith.addf %361, %362 : vector<2x32xf32>
    %364 = math.tanh %363 : vector<2x32xf32>
    %365 = arith.mulf %360, %364 : vector<2x32xf32>
    %366 = vector.extract_strided_slice %279 {offsets = [6, 0], sizes = [2, 128], strides = [1, 1]} : vector<16x128xf32> to vector<2x128xf32>
    %cst_81 = arith.constant dense<0.000000e+00> : vector<2x128xf32>
    %367 = tpu.matmul %365, %274, %cst_81 {dimension_numbers = #tpu.dot_dimension_numbers<[1], [0], [0], [1], [0, 0, 1, 1], [], []>} : vector<2x32xf32>, vector<32x128xf32>, vector<2x128xf32> -> vector<2x128xf32>
    %368 = arith.addf %366, %367 : vector<2x128xf32>
    %369 = vector.extract_strided_slice %368 {offsets = [0, 0], sizes = [2, 32], strides = [1, 1]} : vector<2x128xf32> to vector<2x32xf32>
    %370 = arith.negf %369 : vector<2x32xf32>
    %371 = math.exp %370 : vector<2x32xf32>
    %cst_82 = arith.constant 1.000000e+00 : f32
    %372 = vector.broadcast %cst_82 : f32 to vector<2x32xf32>
    %373 = arith.addf %372, %371 : vector<2x32xf32>
    %374 = arith.divf %372, %373 : vector<2x32xf32>
    %375 = vector.extract_strided_slice %368 {offsets = [0, 32], sizes = [2, 32], strides = [1, 1]} : vector<2x128xf32> to vector<2x32xf32>
    %376 = arith.negf %375 : vector<2x32xf32>
    %377 = math.exp %376 : vector<2x32xf32>
    %cst_83 = arith.constant 1.000000e+00 : f32
    %378 = vector.broadcast %cst_83 : f32 to vector<2x32xf32>
    %379 = arith.addf %378, %377 : vector<2x32xf32>
    %380 = arith.divf %378, %379 : vector<2x32xf32>
    %381 = vector.extract_strided_slice %368 {offsets = [0, 64], sizes = [2, 32], strides = [1, 1]} : vector<2x128xf32> to vector<2x32xf32>
    %382 = math.tanh %381 : vector<2x32xf32>
    %383 = vector.extract_strided_slice %368 {offsets = [0, 96], sizes = [2, 32], strides = [1, 1]} : vector<2x128xf32> to vector<2x32xf32>
    %384 = arith.negf %383 : vector<2x32xf32>
    %385 = math.exp %384 : vector<2x32xf32>
    %cst_84 = arith.constant 1.000000e+00 : f32
    %386 = vector.broadcast %cst_84 : f32 to vector<2x32xf32>
    %387 = arith.addf %386, %385 : vector<2x32xf32>
    %388 = arith.divf %386, %387 : vector<2x32xf32>
    %389 = arith.mulf %380, %363 : vector<2x32xf32>
    %390 = arith.mulf %374, %382 : vector<2x32xf32>
    %391 = arith.addf %389, %390 : vector<2x32xf32>
    %392 = math.tanh %391 : vector<2x32xf32>
    %393 = arith.mulf %388, %392 : vector<2x32xf32>
    %394 = vector.extract_strided_slice %279 {offsets = [8, 0], sizes = [2, 128], strides = [1, 1]} : vector<16x128xf32> to vector<2x128xf32>
    %cst_85 = arith.constant dense<0.000000e+00> : vector<2x128xf32>
    %395 = tpu.matmul %393, %274, %cst_85 {dimension_numbers = #tpu.dot_dimension_numbers<[1], [0], [0], [1], [0, 0, 1, 1], [], []>} : vector<2x32xf32>, vector<32x128xf32>, vector<2x128xf32> -> vector<2x128xf32>
    %396 = arith.addf %394, %395 : vector<2x128xf32>
    %397 = vector.extract_strided_slice %396 {offsets = [0, 0], sizes = [2, 32], strides = [1, 1]} : vector<2x128xf32> to vector<2x32xf32>
    %398 = arith.negf %397 : vector<2x32xf32>
    %399 = math.exp %398 : vector<2x32xf32>
    %cst_86 = arith.constant 1.000000e+00 : f32
    %400 = vector.broadcast %cst_86 : f32 to vector<2x32xf32>
    %401 = arith.addf %400, %399 : vector<2x32xf32>
    %402 = arith.divf %400, %401 : vector<2x32xf32>
    %403 = vector.extract_strided_slice %396 {offsets = [0, 32], sizes = [2, 32], strides = [1, 1]} : vector<2x128xf32> to vector<2x32xf32>
    %404 = arith.negf %403 : vector<2x32xf32>
    %405 = math.exp %404 : vector<2x32xf32>
    %cst_87 = arith.constant 1.000000e+00 : f32
    %406 = vector.broadcast %cst_87 : f32 to vector<2x32xf32>
    %407 = arith.addf %406, %405 : vector<2x32xf32>
    %408 = arith.divf %406, %407 : vector<2x32xf32>
    %409 = vector.extract_strided_slice %396 {offsets = [0, 64], sizes = [2, 32], strides = [1, 1]} : vector<2x128xf32> to vector<2x32xf32>
    %410 = math.tanh %409 : vector<2x32xf32>
    %411 = vector.extract_strided_slice %396 {offsets = [0, 96], sizes = [2, 32], strides = [1, 1]} : vector<2x128xf32> to vector<2x32xf32>
    %412 = arith.negf %411 : vector<2x32xf32>
    %413 = math.exp %412 : vector<2x32xf32>
    %cst_88 = arith.constant 1.000000e+00 : f32
    %414 = vector.broadcast %cst_88 : f32 to vector<2x32xf32>
    %415 = arith.addf %414, %413 : vector<2x32xf32>
    %416 = arith.divf %414, %415 : vector<2x32xf32>
    %417 = arith.mulf %408, %391 : vector<2x32xf32>
    %418 = arith.mulf %402, %410 : vector<2x32xf32>
    %419 = arith.addf %417, %418 : vector<2x32xf32>
    %420 = math.tanh %419 : vector<2x32xf32>
    %421 = arith.mulf %416, %420 : vector<2x32xf32>
    %422 = vector.extract_strided_slice %279 {offsets = [10, 0], sizes = [2, 128], strides = [1, 1]} : vector<16x128xf32> to vector<2x128xf32>
    %cst_89 = arith.constant dense<0.000000e+00> : vector<2x128xf32>
    %423 = tpu.matmul %421, %274, %cst_89 {dimension_numbers = #tpu.dot_dimension_numbers<[1], [0], [0], [1], [0, 0, 1, 1], [], []>} : vector<2x32xf32>, vector<32x128xf32>, vector<2x128xf32> -> vector<2x128xf32>
    %424 = arith.addf %422, %423 : vector<2x128xf32>
    %425 = vector.extract_strided_slice %424 {offsets = [0, 0], sizes = [2, 32], strides = [1, 1]} : vector<2x128xf32> to vector<2x32xf32>
    %426 = arith.negf %425 : vector<2x32xf32>
    %427 = math.exp %426 : vector<2x32xf32>
    %cst_90 = arith.constant 1.000000e+00 : f32
    %428 = vector.broadcast %cst_90 : f32 to vector<2x32xf32>
    %429 = arith.addf %428, %427 : vector<2x32xf32>
    %430 = arith.divf %428, %429 : vector<2x32xf32>
    %431 = vector.extract_strided_slice %424 {offsets = [0, 32], sizes = [2, 32], strides = [1, 1]} : vector<2x128xf32> to vector<2x32xf32>
    %432 = arith.negf %431 : vector<2x32xf32>
    %433 = math.exp %432 : vector<2x32xf32>
    %cst_91 = arith.constant 1.000000e+00 : f32
    %434 = vector.broadcast %cst_91 : f32 to vector<2x32xf32>
    %435 = arith.addf %434, %433 : vector<2x32xf32>
    %436 = arith.divf %434, %435 : vector<2x32xf32>
    %437 = vector.extract_strided_slice %424 {offsets = [0, 64], sizes = [2, 32], strides = [1, 1]} : vector<2x128xf32> to vector<2x32xf32>
    %438 = math.tanh %437 : vector<2x32xf32>
    %439 = vector.extract_strided_slice %424 {offsets = [0, 96], sizes = [2, 32], strides = [1, 1]} : vector<2x128xf32> to vector<2x32xf32>
    %440 = arith.negf %439 : vector<2x32xf32>
    %441 = math.exp %440 : vector<2x32xf32>
    %cst_92 = arith.constant 1.000000e+00 : f32
    %442 = vector.broadcast %cst_92 : f32 to vector<2x32xf32>
    %443 = arith.addf %442, %441 : vector<2x32xf32>
    %444 = arith.divf %442, %443 : vector<2x32xf32>
    %445 = arith.mulf %436, %419 : vector<2x32xf32>
    %446 = arith.mulf %430, %438 : vector<2x32xf32>
    %447 = arith.addf %445, %446 : vector<2x32xf32>
    %448 = math.tanh %447 : vector<2x32xf32>
    %449 = arith.mulf %444, %448 : vector<2x32xf32>
    %450 = vector.extract_strided_slice %279 {offsets = [12, 0], sizes = [2, 128], strides = [1, 1]} : vector<16x128xf32> to vector<2x128xf32>
    %cst_93 = arith.constant dense<0.000000e+00> : vector<2x128xf32>
    %451 = tpu.matmul %449, %274, %cst_93 {dimension_numbers = #tpu.dot_dimension_numbers<[1], [0], [0], [1], [0, 0, 1, 1], [], []>} : vector<2x32xf32>, vector<32x128xf32>, vector<2x128xf32> -> vector<2x128xf32>
    %452 = arith.addf %450, %451 : vector<2x128xf32>
    %453 = vector.extract_strided_slice %452 {offsets = [0, 0], sizes = [2, 32], strides = [1, 1]} : vector<2x128xf32> to vector<2x32xf32>
    %454 = arith.negf %453 : vector<2x32xf32>
    %455 = math.exp %454 : vector<2x32xf32>
    %cst_94 = arith.constant 1.000000e+00 : f32
    %456 = vector.broadcast %cst_94 : f32 to vector<2x32xf32>
    %457 = arith.addf %456, %455 : vector<2x32xf32>
    %458 = arith.divf %456, %457 : vector<2x32xf32>
    %459 = vector.extract_strided_slice %452 {offsets = [0, 32], sizes = [2, 32], strides = [1, 1]} : vector<2x128xf32> to vector<2x32xf32>
    %460 = arith.negf %459 : vector<2x32xf32>
    %461 = math.exp %460 : vector<2x32xf32>
    %cst_95 = arith.constant 1.000000e+00 : f32
    %462 = vector.broadcast %cst_95 : f32 to vector<2x32xf32>
    %463 = arith.addf %462, %461 : vector<2x32xf32>
    %464 = arith.divf %462, %463 : vector<2x32xf32>
    %465 = vector.extract_strided_slice %452 {offsets = [0, 64], sizes = [2, 32], strides = [1, 1]} : vector<2x128xf32> to vector<2x32xf32>
    %466 = math.tanh %465 : vector<2x32xf32>
    %467 = vector.extract_strided_slice %452 {offsets = [0, 96], sizes = [2, 32], strides = [1, 1]} : vector<2x128xf32> to vector<2x32xf32>
    %468 = arith.negf %467 : vector<2x32xf32>
    %469 = math.exp %468 : vector<2x32xf32>
    %cst_96 = arith.constant 1.000000e+00 : f32
    %470 = vector.broadcast %cst_96 : f32 to vector<2x32xf32>
    %471 = arith.addf %470, %469 : vector<2x32xf32>
    %472 = arith.divf %470, %471 : vector<2x32xf32>
    %473 = arith.mulf %464, %447 : vector<2x32xf32>
    %474 = arith.mulf %458, %466 : vector<2x32xf32>
    %475 = arith.addf %473, %474 : vector<2x32xf32>
    %476 = math.tanh %475 : vector<2x32xf32>
    %477 = arith.mulf %472, %476 : vector<2x32xf32>
    %478 = vector.extract_strided_slice %279 {offsets = [14, 0], sizes = [2, 128], strides = [1, 1]} : vector<16x128xf32> to vector<2x128xf32>
    %cst_97 = arith.constant dense<0.000000e+00> : vector<2x128xf32>
    %479 = tpu.matmul %477, %274, %cst_97 {dimension_numbers = #tpu.dot_dimension_numbers<[1], [0], [0], [1], [0, 0, 1, 1], [], []>} : vector<2x32xf32>, vector<32x128xf32>, vector<2x128xf32> -> vector<2x128xf32>
    %480 = arith.addf %478, %479 : vector<2x128xf32>
    %481 = vector.extract_strided_slice %480 {offsets = [0, 0], sizes = [2, 32], strides = [1, 1]} : vector<2x128xf32> to vector<2x32xf32>
    %482 = arith.negf %481 : vector<2x32xf32>
    %483 = math.exp %482 : vector<2x32xf32>
    %cst_98 = arith.constant 1.000000e+00 : f32
    %484 = vector.broadcast %cst_98 : f32 to vector<2x32xf32>
    %485 = arith.addf %484, %483 : vector<2x32xf32>
    %486 = arith.divf %484, %485 : vector<2x32xf32>
    %487 = vector.extract_strided_slice %480 {offsets = [0, 32], sizes = [2, 32], strides = [1, 1]} : vector<2x128xf32> to vector<2x32xf32>
    %488 = arith.negf %487 : vector<2x32xf32>
    %489 = math.exp %488 : vector<2x32xf32>
    %cst_99 = arith.constant 1.000000e+00 : f32
    %490 = vector.broadcast %cst_99 : f32 to vector<2x32xf32>
    %491 = arith.addf %490, %489 : vector<2x32xf32>
    %492 = arith.divf %490, %491 : vector<2x32xf32>
    %493 = vector.extract_strided_slice %480 {offsets = [0, 64], sizes = [2, 32], strides = [1, 1]} : vector<2x128xf32> to vector<2x32xf32>
    %494 = math.tanh %493 : vector<2x32xf32>
    %495 = vector.extract_strided_slice %480 {offsets = [0, 96], sizes = [2, 32], strides = [1, 1]} : vector<2x128xf32> to vector<2x32xf32>
    %496 = arith.negf %495 : vector<2x32xf32>
    %497 = math.exp %496 : vector<2x32xf32>
    %cst_100 = arith.constant 1.000000e+00 : f32
    %498 = vector.broadcast %cst_100 : f32 to vector<2x32xf32>
    %499 = arith.addf %498, %497 : vector<2x32xf32>
    %500 = arith.divf %498, %499 : vector<2x32xf32>
    %501 = arith.mulf %492, %475 : vector<2x32xf32>
    %502 = arith.mulf %486, %494 : vector<2x32xf32>
    %503 = arith.addf %501, %502 : vector<2x32xf32>
    %504 = math.tanh %503 : vector<2x32xf32>
    %505 = arith.mulf %500, %504 : vector<2x32xf32>
    %cst_101 = arith.constant 0.000000e+00 : f32
    %506 = vector.broadcast %cst_101 : f32 to vector<2x32xf32>
    %507 = arith.maximumf %505, %506 : vector<2x32xf32>
    %c0_102 = arith.constant 0 : index
    %c0_103 = arith.constant 0 : index
    %508 = vector.load %arg7[%c0_102, %c0_103] : memref<32x32xf32, #tpu.memory_space<vmem>>, vector<32x32xf32>
    %cst_104 = arith.constant dense<0.000000e+00> : vector<2x32xf32>
    %509 = tpu.matmul %507, %508, %cst_104 {dimension_numbers = #tpu.dot_dimension_numbers<[1], [0], [0], [1], [0, 0, 1, 1], [], []>} : vector<2x32xf32>, vector<32x32xf32>, vector<2x32xf32> -> vector<2x32xf32>
    %c0_105 = arith.constant 0 : index
    %c0_106 = arith.constant 0 : index
    %510 = vector.load %arg8[%c0_105, %c0_106] : memref<1x32xf32, #tpu.memory_space<vmem>>, vector<1x32xf32>
    %511 = vector.broadcast %510 : vector<1x32xf32> to vector<2x32xf32>
    %512 = arith.addf %509, %511 : vector<2x32xf32>
    %cst_107 = arith.constant 0.000000e+00 : f32
    %513 = vector.broadcast %cst_107 : f32 to vector<2x32xf32>
    %514 = arith.maximumf %512, %513 : vector<2x32xf32>
    %c0_108 = arith.constant 0 : index
    %c0_109 = arith.constant 0 : index
    %515 = vector.load %arg9[%c0_108, %c0_109] : memref<32x8xf32, #tpu.memory_space<vmem>>, vector<32x8xf32>
    %cst_110 = arith.constant dense<0.000000e+00> : vector<2x8xf32>
    %516 = tpu.matmul %514, %515, %cst_110 {dimension_numbers = #tpu.dot_dimension_numbers<[1], [0], [0], [1], [0, 0, 1, 1], [], []>} : vector<2x32xf32>, vector<32x8xf32>, vector<2x8xf32> -> vector<2x8xf32>
    %c0_111 = arith.constant 0 : index
    %c0_112 = arith.constant 0 : index
    %517 = vector.load %arg10[%c0_111, %c0_112] : memref<1x8xf32, #tpu.memory_space<vmem>>, vector<1x8xf32>
    %518 = vector.broadcast %517 : vector<1x8xf32> to vector<2x8xf32>
    %519 = arith.addf %516, %518 : vector<2x8xf32>
    %cst_113 = arith.constant 0.000000e+00 : f32
    %520 = vector.broadcast %cst_113 : f32 to vector<2x8xf32>
    %521 = arith.maximumf %519, %520 : vector<2x8xf32>
    %c0_114 = arith.constant 0 : index
    %c0_115 = arith.constant 0 : index
    %522 = vector.load %arg11[%c0_114, %c0_115] : memref<2x8xf32, #tpu.memory_space<vmem>>, vector<2x8xf32>
    tpu.vector_store %arg11[%c0_114, %c0_115], %521 {strides = array<i32>} : memref<2x8xf32, #tpu.memory_space<vmem>>, vector<2x8xf32>,
    return
  }
}

</mosaic_0001>

<llo_original>
// kernel: tpu_custom_call.1
$region0: #{tpu_custom_call.1}
  #allocation0 [shape = 'u32[]', space=smem, size = 0x4, offset = 0x4, fixed_abs, tag = 'smem constant byte address 0x4 - core index']
  #allocation1 [shape = 'u32[72,128]{1,0:T(1,128)}', space=vmem, size = 0x9000, scoped, tag = 'internal scratch']
  #allocation2 [shape = 'f32[16,32]{1,0:T(8,128)}', space=vmem, size = 0x2000, scoped, tag = 'scratch operand']
  %s0 = inlined_call_operand.hbm [shape: f32[16,16], index: 0, kind: input, shape index: {}]
  %s1 = inlined_call_operand.hbm [shape: f32[16,128], index: 1, kind: input, shape index: {}]
  %s2 = inlined_call_operand.vmem [shape: f32[32,128], index: 2, kind: input, shape index: {}]
  %s3 = inlined_call_operand.vmem [shape: f32[1,128], index: 3, kind: input, shape index: {}]
  %s4 = inlined_call_operand.hbm [shape: f32[32,128], index: 4, kind: input, shape index: {}]
  %s5 = inlined_call_operand.hbm [shape: f32[32,128], index: 5, kind: input, shape index: {}]
  %s6 = inlined_call_operand.vmem [shape: f32[1,128], index: 6, kind: input, shape index: {}]
  %s7 = inlined_call_operand.hbm [shape: f32[32,32], index: 7, kind: input, shape index: {}]
  %s8 = inlined_call_operand.vmem [shape: f32[1,32], index: 8, kind: input, shape index: {}]
  %s9 = inlined_call_operand.vmem [shape: f32[32,8], index: 9, kind: input, shape index: {}]
  %s10 = inlined_call_operand.vmem [shape: f32[1,8], index: 10, kind: input, shape index: {}]
  %s11 = inlined_call_operand.hbm [shape: f32[2,8], index: 11, kind: output, shape index: {}]
  %s12 = sld [smem:[#allocation0]]
  $region74: #{tpu_custom_call.1} parent=0
    _
  %s14 = ssub.s32 1, %s12
  %s15 = scalar_select 0, %s14, %s12
  $region1: #{tpu_custom_call.1} parent=0
    #allocation3 [shape = 'u8[8192]{0}', space=vmem, size = 0x2000, scoped, tag = 'input window, operand 0, single buffered']
    #allocation4 [shape = 's32[1]{0}', space=sflag, size = 0x4, scoped, tag = 'scoped memory for tpu_custom_call.1']
    #allocation5 [shape = 's32[1]{0}', space=sflag, size = 0x4, scoped, tag = 'scoped memory for tpu_custom_call.1']
    #allocation6 [shape = 'u8[8192]{0}', space=vmem, size = 0x2000, scoped, tag = 'input window, operand 1, single buffered']
    #allocation7 [shape = 's32[1]{0}', space=sflag, size = 0x4, scoped, tag = 'scoped memory for tpu_custom_call.1']
    #allocation8 [shape = 'u8[16384]{0}', space=vmem, size = 0x4000, scoped, tag = 'input window, operand 4, single buffered']
    #allocation9 [shape = 'u8[16384]{0}', space=vmem, size = 0x4000, scoped, tag = 'input window, operand 5, single buffered']
    #allocation10 [shape = 's32[1]{0}', space=sflag, size = 0x4, scoped, tag = 'scoped memory for tpu_custom_call.1']
    #allocation11 [shape = 'u8[16384]{0}', space=vmem, size = 0x4000, scoped, tag = 'input window, operand 7, single buffered']
    #allocation12 [shape = 'u8[1024]{0}', space=vmem, size = 0x400, scoped, tag = 'output window, operand 0, single buffered']
    %16 = vsyncpa [#allocation4], 0
    %17 = vsyncpa [#allocation7], 0
    %18 = vsyncpa [#allocation10], 0
    %19 = vsyncpa [#allocation5], 0
    // Predicated region
    $region2: #{tpu_custom_call.1} parent=1 // pred_check
      _
    $region3: #{tpu_custom_call.1} parent=1 // pred_check_branch
      %21 = sbr.rel (0) target = $region5
    $region4: #{tpu_custom_call.1} parent=1 // pred_region
      %23 = vsyncadd [#allocation4], 0
      %s24 = sshll.u32 %s0, 4
      %s25 = int_to_ptr.hbm [resolvable:$true] %s24
      %s26 = sshll.u32 [#allocation3], 4
      %s27 = int_to_ptr.vmem [resolvable:$true] %s26
      %32 = dma.hbm_to_vmem [thread:$0]  %s25, 256, %s27, [#allocation4], 128, 128, 8
    $region5: #{tpu_custom_call.1} parent=1 // pred_fallthru
      _
    // Predicated region
    $region6: #{tpu_custom_call.1} parent=1 // pred_check
      _
    $region7: #{tpu_custom_call.1} parent=1 // pred_check_branch
      %34 = sbr.rel (0) target = $region9
    $region8: #{tpu_custom_call.1} parent=1 // pred_region
      %36 = vsyncadd [#allocation7], 0
      %s37 = sshll.u32 %s1, 4
      %s38 = int_to_ptr.hbm [resolvable:$true] %s37
      %s39 = sshll.u32 [#allocation6], 4
      %s40 = int_to_ptr.vmem [resolvable:$true] %s39
      %45 = dma.hbm_to_vmem [thread:$0]  %s38, 256, %s40, [#allocation7], 128, 128, 8
    $region9: #{tpu_custom_call.1} parent=1 // pred_fallthru
      _
    // Predicated region
    $region10: #{tpu_custom_call.1} parent=1 // pred_check
      _
    $region11: #{tpu_custom_call.1} parent=1 // pred_check_branch
      %47 = sbr.rel (0) target = $region13
    $region12: #{tpu_custom_call.1} parent=1 // pred_region
      _
    $region13: #{tpu_custom_call.1} parent=1 // pred_fallthru
      _
    // Predicated region
    $region14: #{tpu_custom_call.1} parent=1 // pred_check
      _
    $region15: #{tpu_custom_call.1} parent=1 // pred_check_branch
      %49 = sbr.rel (0) target = $region17
    $region16: #{tpu_custom_call.1} parent=1 // pred_region
      _
    $region17: #{tpu_custom_call.1} parent=1 // pred_fallthru
      _
    // Predicated region
    $region18: #{tpu_custom_call.1} parent=1 // pred_check
      _
    $region19: #{tpu_custom_call.1} parent=1 // pred_check_branch
      %51 = sbr.rel (0) target = $region21
    $region20: #{tpu_custom_call.1} parent=1 // pred_region
      %53 = vsyncadd [#allocation7], 0
      %s54 = sshll.u32 %s4, 4
      %s55 = int_to_ptr.hbm [resolvable:$true] %s54
      %s56 = sshll.u32 [#allocation8], 4
      %s57 = int_to_ptr.vmem [resolvable:$true] %s56
      %62 = dma.hbm_to_vmem [thread:$0]  %s55, 512, %s57, [#allocation7], 128, 128, 8
    $region21: #{tpu_custom_call.1} parent=1 // pred_fallthru
      _
    // Predicated region
    $region22: #{tpu_custom_call.1} parent=1 // pred_check
      _
    $region23: #{tpu_custom_call.1} parent=1 // pred_check_branch
      %64 = sbr.rel (0) target = $region25
    $region24: #{tpu_custom_call.1} parent=1 // pred_region
      %66 = vsyncadd [#allocation10], 0
      %s67 = sshll.u32 %s5, 4
      %s68 = int_to_ptr.hbm [resolvable:$true] %s67
      %s69 = sshll.u32 [#allocation9], 4
      %s70 = int_to_ptr.vmem [resolvable:$true] %s69
      %75 = dma.hbm_to_vmem [thread:$0]  %s68, 512, %s70, [#allocation10], 128, 128, 8
    $region25: #{tpu_custom_call.1} parent=1 // pred_fallthru
      _
    // Predicated region
    $region26: #{tpu_custom_call.1} parent=1 // pred_check
      _
    $region27: #{tpu_custom_call.1} parent=1 // pred_check_branch
      %77 = sbr.rel (0) target = $region29
    $region28: #{tpu_custom_call.1} parent=1 // pred_region
      _
    $region29: #{tpu_custom_call.1} parent=1 // pred_fallthru
      _
    // Predicated region
    $region30: #{tpu_custom_call.1} parent=1 // pred_check
      _
    $region31: #{tpu_custom_call.1} parent=1 // pred_check_branch
      %79 = sbr.rel (0) target = $region33
    $region32: #{tpu_custom_call.1} parent=1 // pred_region
      %81 = vsyncadd [#allocation10], 0
      %s82 = sshll.u32 %s7, 4
      %s83 = int_to_ptr.hbm [resolvable:$true] %s82
      %s84 = sshll.u32 [#allocation11], 4
      %s85 = int_to_ptr.vmem [resolvable:$true] %s84
      %90 = dma.hbm_to_vmem [thread:$0]  %s83, 512, %s85, [#allocation10], 128, 128, 8
    $region33: #{tpu_custom_call.1} parent=1 // pred_fallthru
      _
    // Predicated region
    $region34: #{tpu_custom_call.1} parent=1 // pred_check
      _
    $region35: #{tpu_custom_call.1} parent=1 // pred_check_branch
      %92 = sbr.rel (0) target = $region37
    $region36: #{tpu_custom_call.1} parent=1 // pred_region
      _
    $region37: #{tpu_custom_call.1} parent=1 // pred_fallthru
      _
    // Predicated region
    $region38: #{tpu_custom_call.1} parent=1 // pred_check
      _
    $region39: #{tpu_custom_call.1} parent=1 // pred_check_branch
      %94 = sbr.rel (0) target = $region41
    $region40: #{tpu_custom_call.1} parent=1 // pred_region
      _
    $region41: #{tpu_custom_call.1} parent=1 // pred_fallthru
      _
    // Predicated region
    $region42: #{tpu_custom_call.1} parent=1 // pred_check
      _
    $region43: #{tpu_custom_call.1} parent=1 // pred_check_branch
      %96 = sbr.rel (0) target = $region45
    $region44: #{tpu_custom_call.1} parent=1 // pred_region
      _
    $region45: #{tpu_custom_call.1} parent=1 // pred_fallthru
      _
    // Predicated region
    $region46: #{tpu_custom_call.1} parent=1 // pred_check
      _
    $region47: #{tpu_custom_call.1} parent=1 // pred_check_branch
      %98 = sbr.rel (0) target = $region49
    $region48: #{tpu_custom_call.1} parent=1 // pred_region
      %100 = dma.done [#allocation4], 256
    $region49: #{tpu_custom_call.1} parent=1 // pred_fallthru
      _
    // Predicated region
    $region50: #{tpu_custom_call.1} parent=1 // pred_check
      _
    $region51: #{tpu_custom_call.1} parent=1 // pred_check_branch
      %102 = sbr.rel (0) target = $region53
    $region52: #{tpu_custom_call.1} parent=1 // pred_region
      %104 = dma.done [#allocation7], 256
    $region53: #{tpu_custom_call.1} parent=1 // pred_fallthru
      _
    // Predicated region
    $region54: #{tpu_custom_call.1} parent=1 // pred_check
      _
    $region55: #{tpu_custom_call.1} parent=1 // pred_check_branch
      %106 = sbr.rel (0) target = $region57
    $region56: #{tpu_custom_call.1} parent=1 // pred_region
      %108 = dma.done [#allocation7], 512
    $region57: #{tpu_custom_call.1} parent=1 // pred_fallthru
      _
    // Predicated region
    $region58: #{tpu_custom_call.1} parent=1 // pred_check
      _
    $region59: #{tpu_custom_call.1} parent=1 // pred_check_branch
      %110 = sbr.rel (0) target = $region61
    $region60: #{tpu_custom_call.1} parent=1 // pred_region
      %112 = dma.done [#allocation10], 512
    $region61: #{tpu_custom_call.1} parent=1 // pred_fallthru
      _
    // Predicated region
    $region62: #{tpu_custom_call.1} parent=1 // pred_check
      _
    $region63: #{tpu_custom_call.1} parent=1 // pred_check_branch
      %114 = sbr.rel (0) target = $region65
    $region64: #{tpu_custom_call.1} parent=1 // pred_region
      %116 = dma.done [#allocation10], 512
    $region65: #{tpu_custom_call.1} parent=1 // pred_fallthru
      _
    %v117 = vld [vmem:[#allocation6] sm:$0xff]
    %v118 = vld [vmem:[#allocation6 + $0x8] sm:$0xff]
    %v119 = vld [vmem:[%s2] sm:$0xff]
    %v120 = vld [vmem:[%s2 + $0x8] sm:$0xff]
    %v121 = vld [vmem:[%s2 + $0x10] sm:$0xff]
    %v122 = vld [vmem:[%s2 + $0x18] sm:$0xff]
    %v123 = vld [vmem:[%s3] sm:$0x1]
    %v124 = vld [vmem:[#allocation3] sm:$0xff]
    %v125 = vld [vmem:[#allocation3 + $0x8] sm:$0xff]
    %v127 = vperm.slane %v123, 0
    %vm129 = vcmask 130048
    %v131 = vsel %vm129, %v124, 0
    %v134 = vsel %vm129, %v125, 0
    %136 = vmatpush.msra.mxu0 0.0
    %137 = vmatpush.msra.mxu0 0.0
    %138 = vmatpush.msra.mxu0 0.0
    %139 = vmatpush.msra.mxu0 0.0
    %140 = vmatpush.msra.mxu0 0.0
    %141 = vmatpush.msra.mxu0 0.0
    %142 = vmatpush.msra.mxu0 0.0
    %143 = vmatpush.msra.mxu0 0.0
    %144 = vmatpush.msra.mxu0 0.0
    %145 = vmatpush.msra.mxu0 0.0
    %146 = vmatpush.msra.mxu0 0.0
    %147 = vmatpush.msra.mxu0 0.0
    %148 = vmatpush.msra.mxu0 0.0
    %149 = vmatpush.msra.mxu0 0.0
    %150 = vmatpush.msra.mxu0 %v118
    %151 = vmatpush.msra.mxu0 %v117
    %152 = vmatmul.f32.gmra.mxu0 %v131
    %v153 = vpop.f32.mrf.mxu0
    %v154 = vadd.f32 %v127, %v153
    %155 = vmatmul.f32.gmra.mxu0 %v134
    %v156 = vpop.f32.mrf.mxu0
    %v157 = vadd.f32 %v127, %v156
    %158 = vdwg.mxu0
    %v160 = vrot.slane %v157, 7
    %vm162 = vcmask 1040384
    %v163 = vsel %vm162, %v154, %v160
    %vm164 = vcmask 261120
    %v166 = vsel %vm164, 0.0, 0
    %168 = vmatpush.msra.mxu0 0.0
    %169 = vmatpush.msra.mxu0 0.0
    %170 = vmatpush.msra.mxu0 0.0
    %171 = vmatpush.msra.mxu0 0.0
    %172 = vmatpush.msra.mxu0 0.0
    %173 = vmatpush.msra.mxu0 0.0
    %174 = vmatpush.msra.mxu0 0.0
    %175 = vmatpush.msra.mxu0 0.0
    %176 = vmatpush.msra.mxu0 0.0
    %177 = vmatpush.msra.mxu0 0.0
    %178 = vmatpush.msra.mxu0 0.0
    %179 = vmatpush.msra.mxu0 0.0
    %180 = vmatpush.msra.mxu0 %v122
    %181 = vmatpush.msra.mxu0 %v121
    %182 = vmatpush.msra.mxu0 %v120
    %183 = vmatpush.msra.mxu0 %v119
    %184 = vmatmul.f32.gmra.mxu0 %v166
    %v185 = vpop.f32.mrf.mxu0
    %v186 = vadd.f32 0.0, %v185
    %187 = vdwg.mxu0
    %v188 = vadd.f32 %v163, %v186
    %v189 = vxor.u32 %v188, 2147483648
    %v190 = vmul.f32 %v189, 1.442695
    %v191 = vpow.pop %v190
    %v192 = vadd.f32 %v191, 1.0
    %v193 = vrcp.pop %v192
    %v194 = vmul.f32 %v192, %v193
    %v195 = vsub.f32 1.0, %v194
    %v196 = vmul.f32 %v193, %v195
    %v197 = vadd.f32 %v193, %v196
    %vm198 = vweird.f32 %v192
    %vm199 = vweird.f32 %v193
    %vm200 = vmor %vm198, %vm199
    %v201 = vsel %vm200, %v193, %v197
    %v202 = vand.u32 2147483647, %v192
    %vm203 = vcmp.eq.f32.partialorder %v202, 8.507059e+37
    %v204 = vand.u32 %v192, 2147483648
    %v205 = vor.u32 1.1754944e-38, %v204
    %v206 = vsel %vm203, %v205, %v201
    %v207 = vmul.f32 1.0, %v206
    %v208 = vtanh.pop %v188
    %v209 = vmul.f32 %v207, 0.0
    %211 = vrot.lane.b32.xlu0 %v208, 64
    %v212 = vpop.permute.xlu0 %211
    %v214 = vmul.f32 %v207, %v212
    %216 = vrot.lane.b32.xlu0 %v214, 32
    %v217 = vpop.permute.xlu0 %216
    %v219 = vadd.f32 %v209, %v217
    %v220 = vtanh.pop %v219
    %222 = vrot.lane.b32.xlu0 %v220, 64
    %v223 = vpop.permute.xlu0 %222
    %v225 = vmul.f32 %v207, %v223
    %v226 = vmax.f32 %v225, 0.0
    %228 = vrot.lane.b32.xlu0 %v226, 32
    %v229 = vpop.permute.xlu0 %228
    %vm231 = vcmask 254976
    %232 = vst.msk [vmem:[#allocation2] sm:$0x3] %vm231, %v229
    %v234 = vrot.slane %v154, 1
    %v236 = vsel %vm162, %v234, %v157
    %238 = vrot.lane.b32.xlu0 %v225, 32
    %v239 = vpop.permute.xlu0 %238
    %v240 = vsel %vm164, %v239, 0
    %242 = vmatpush.msra.mxu0 0.0
    %243 = vmatpush.msra.mxu0 0.0
    %244 = vmatpush.msra.mxu0 0.0
    %245 = vmatpush.msra.mxu0 0.0
    %246 = vmatpush.msra.mxu0 0.0
    %247 = vmatpush.msra.mxu0 0.0
    %248 = vmatpush.msra.mxu0 0.0
    %249 = vmatpush.msra.mxu0 0.0
    %250 = vmatpush.msra.mxu0 0.0
    %251 = vmatpush.msra.mxu0 0.0
    %252 = vmatpush.msra.mxu0 0.0
    %253 = vmatpush.msra.mxu0 0.0
    %254 = vmatpush.msra.mxu0 %v122
    %255 = vmatpush.msra.mxu0 %v121
    %256 = vmatpush.msra.mxu0 %v120
    %257 = vmatpush.msra.mxu0 %v119
    %258 = vmatmul.f32.gmra.mxu0 %v240
    %v259 = vpop.f32.mrf.mxu0
    %v260 = vadd.f32 0.0, %v259
    %261 = vdwg.mxu0
    %v262 = vadd.f32 %v236, %v260
    %v263 = vxor.u32 %v262, 2147483648
    %v264 = vmul.f32 %v263, 1.442695
    %v265 = vpow.pop %v264
    %v266 = vadd.f32 %v265, 1.0
    %v267 = vrcp.pop %v266
    %v268 = vmul.f32 %v266, %v267
    %v269 = vsub.f32 1.0, %v268
    %v270 = vmul.f32 %v267, %v269
    %v271 = vadd.f32 %v267, %v270
    %vm272 = vweird.f32 %v266
    %vm273 = vweird.f32 %v267
    %vm274 = vmor %vm272, %vm273
    %v275 = vsel %vm274, %v267, %v271
    %v276 = vand.u32 2147483647, %v266
    %vm277 = vcmp.eq.f32.partialorder %v276, 8.507059e+37
    %v278 = vand.u32 %v266, 2147483648
    %v279 = vor.u32 1.1754944e-38, %v278
    %v280 = vsel %vm277, %v279, %v275
    %v281 = vmul.f32 1.0, %v280
    %v282 = vtanh.pop %v262
    %v283 = vmul.f32 %v281, %v219
    %285 = vrot.lane.b32.xlu0 %v282, 64
    %v286 = vpop.permute.xlu0 %285
    %v288 = vmul.f32 %v281, %v286
    %290 = vrot.lane.b32.xlu0 %v288, 32
    %v291 = vpop.permute.xlu0 %290
    %v293 = vadd.f32 %v283, %v291
    %v294 = vtanh.pop %v293
    %296 = vrot.lane.b32.xlu0 %v294, 64
    %v297 = vpop.permute.xlu0 %296
    %v299 = vmul.f32 %v281, %v297
    %v300 = vmax.f32 %v299, 0.0
    %302 = vrot.lane.b32.xlu0 %v300, 32
    %v303 = vpop.permute.xlu0 %302
    %305 = vst.msk [vmem:[#allocation2 + $0x2] sm:$0x3] %vm231, %v303
    %v306 = vrot.slane %v154, 2
    %v308 = vrot.slane %v157, 1
    %v310 = vsel %vm162, %v306, %v308
    %312 = vrot.lane.b32.xlu0 %v299, 32
    %v313 = vpop.permute.xlu0 %312
    %v314 = vsel %vm164, %v313, 0
    %316 = vmatpush.msra.mxu0 0.0
    %317 = vmatpush.msra.mxu0 0.0
    %318 = vmatpush.msra.mxu0 0.0
    %319 = vmatpush.msra.mxu0 0.0
    %320 = vmatpush.msra.mxu0 0.0
    %321 = vmatpush.msra.mxu0 0.0
    %322 = vmatpush.msra.mxu0 0.0
    %323 = vmatpush.msra.mxu0 0.0
    %324 = vmatpush.msra.mxu0 0.0
    %325 = vmatpush.msra.mxu0 0.0
    %326 = vmatpush.msra.mxu0 0.0
    %327 = vmatpush.msra.mxu0 0.0
    %328 = vmatpush.msra.mxu0 %v122
    %329 = vmatpush.msra.mxu0 %v121
    %330 = vmatpush.msra.mxu0 %v120
    %331 = vmatpush.msra.mxu0 %v119
    %332 = vmatmul.f32.gmra.mxu0 %v314
    %v333 = vpop.f32.mrf.mxu0
    %v334 = vadd.f32 0.0, %v333
    %335 = vdwg.mxu0
    %v336 = vadd.f32 %v310, %v334
    %v337 = vxor.u32 %v336, 2147483648
    %v338 = vmul.f32 %v337, 1.442695
    %v339 = vpow.pop %v338
    %v340 = vadd.f32 %v339, 1.0
    %v341 = vrcp.pop %v340
    %v342 = vmul.f32 %v340, %v341
    %v343 = vsub.f32 1.0, %v342
    %v344 = vmul.f32 %v341, %v343
    %v345 = vadd.f32 %v341, %v344
    %vm346 = vweird.f32 %v340
    %vm347 = vweird.f32 %v341
    %vm348 = vmor %vm346, %vm347
    %v349 = vsel %vm348, %v341, %v345
    %v350 = vand.u32 2147483647, %v340
    %vm351 = vcmp.eq.f32.partialorder %v350, 8.507059e+37
    %v352 = vand.u32 %v340, 2147483648
    %v353 = vor.u32 1.1754944e-38, %v352
    %v354 = vsel %vm351, %v353, %v349
    %v355 = vmul.f32 1.0, %v354
    %v356 = vtanh.pop %v336
    %v357 = vmul.f32 %v355, %v293
    %359 = vrot.lane.b32.xlu0 %v356, 64
    %v360 = vpop.permute.xlu0 %359
    %v362 = vmul.f32 %v355, %v360
    %364 = vrot.lane.b32.xlu0 %v362, 32
    %v365 = vpop.permute.xlu0 %364
    %v367 = vadd.f32 %v357, %v365
    %v368 = vtanh.pop %v367
    %370 = vrot.lane.b32.xlu0 %v368, 64
    %v371 = vpop.permute.xlu0 %370
    %v373 = vmul.f32 %v355, %v371
    %v374 = vmax.f32 %v373, 0.0
    %376 = vrot.lane.b32.xlu0 %v374, 32
    %v377 = vpop.permute.xlu0 %376
    %379 = vst.msk [vmem:[#allocation2 + $0x4] sm:$0x3] %vm231, %v377
    %v380 = vrot.slane %v154, 3
    %v382 = vrot.slane %v157, 2
    %v384 = vsel %vm162, %v380, %v382
    %386 = vrot.lane.b32.xlu0 %v373, 32
    %v387 = vpop.permute.xlu0 %386
    %v388 = vsel %vm164, %v387, 0
    %390 = vmatpush.msra.mxu0 0.0
    %391 = vmatpush.msra.mxu0 0.0
    %392 = vmatpush.msra.mxu0 0.0
    %393 = vmatpush.msra.mxu0 0.0
    %394 = vmatpush.msra.mxu0 0.0
    %395 = vmatpush.msra.mxu0 0.0
    %396 = vmatpush.msra.mxu0 0.0
    %397 = vmatpush.msra.mxu0 0.0
    %398 = vmatpush.msra.mxu0 0.0
    %399 = vmatpush.msra.mxu0 0.0
    %400 = vmatpush.msra.mxu0 0.0
    %401 = vmatpush.msra.mxu0 0.0
    %402 = vmatpush.msra.mxu0 %v122
    %403 = vmatpush.msra.mxu0 %v121
    %404 = vmatpush.msra.mxu0 %v120
    %405 = vmatpush.msra.mxu0 %v119
    %406 = vmatmul.f32.gmra.mxu0 %v388
    %v407 = vpop.f32.mrf.mxu0
    %v408 = vadd.f32 0.0, %v407
    %409 = vdwg.mxu0
    %v410 = vadd.f32 %v384, %v408
    %v411 = vxor.u32 %v410, 2147483648
    %v412 = vmul.f32 %v411, 1.442695
    %v413 = vpow.pop %v412
    %v414 = vadd.f32 %v413, 1.0
    %v415 = vrcp.pop %v414
    %v416 = vmul.f32 %v414, %v415
    %v417 = vsub.f32 1.0, %v416
    %v418 = vmul.f32 %v415, %v417
    %v419 = vadd.f32 %v415, %v418
    %vm420 = vweird.f32 %v414
    %vm421 = vweird.f32 %v415
    %vm422 = vmor %vm420, %vm421
    %v423 = vsel %vm422, %v415, %v419
    %v424 = vand.u32 2147483647, %v414
    %vm425 = vcmp.eq.f32.partialorder %v424, 8.507059e+37
    %v426 = vand.u32 %v414, 2147483648
    %v427 = vor.u32 1.1754944e-38, %v426
    %v428 = vsel %vm425, %v427, %v423
    %v429 = vmul.f32 1.0, %v428
    %v430 = vtanh.pop %v410
    %v431 = vmul.f32 %v429, %v367
    %433 = vrot.lane.b32.xlu0 %v430, 64
    %v434 = vpop.permute.xlu0 %433
    %v436 = vmul.f32 %v429, %v434
    %438 = vrot.lane.b32.xlu0 %v436, 32
    %v439 = vpop.permute.xlu0 %438
    %v441 = vadd.f32 %v431, %v439
    %v442 = vtanh.pop %v441
    %444 = vrot.lane.b32.xlu0 %v442, 64
    %v445 = vpop.permute.xlu0 %444
    %v447 = vmul.f32 %v429, %v445
    %v448 = vmax.f32 %v447, 0.0
    %450 = vrot.lane.b32.xlu0 %v448, 32
    %v451 = vpop.permute.xlu0 %450
    %453 = vst.msk [vmem:[#allocation2 + $0x6] sm:$0x3] %vm231, %v451
    %v454 = vrot.slane %v154, 4
    %v456 = vrot.slane %v157, 3
    %v458 = vsel %vm162, %v454, %v456
    %460 = vrot.lane.b32.xlu0 %v447, 32
    %v461 = vpop.permute.xlu0 %460
    %v462 = vsel %vm164, %v461, 0
    %464 = vmatpush.msra.mxu0 0.0
    %465 = vmatpush.msra.mxu0 0.0
    %466 = vmatpush.msra.mxu0 0.0
    %467 = vmatpush.msra.mxu0 0.0
    %468 = vmatpush.msra.mxu0 0.0
    %469 = vmatpush.msra.mxu0 0.0
    %470 = vmatpush.msra.mxu0 0.0
    %471 = vmatpush.msra.mxu0 0.0
    %472 = vmatpush.msra.mxu0 0.0
    %473 = vmatpush.msra.mxu0 0.0
    %474 = vmatpush.msra.mxu0 0.0
    %475 = vmatpush.msra.mxu0 0.0
    %476 = vmatpush.msra.mxu0 %v122
    %477 = vmatpush.msra.mxu0 %v121
    %478 = vmatpush.msra.mxu0 %v120
    %479 = vmatpush.msra.mxu0 %v119
    %480 = vmatmul.f32.gmra.mxu0 %v462
    %v481 = vpop.f32.mrf.mxu0
    %v482 = vadd.f32 0.0, %v481
    %483 = vdwg.mxu0
    %v484 = vadd.f32 %v458, %v482
    %v485 = vxor.u32 %v484, 2147483648
    %v486 = vmul.f32 %v485, 1.442695
    %v487 = vpow.pop %v486
    %v488 = vadd.f32 %v487, 1.0
    %v489 = vrcp.pop %v488
    %v490 = vmul.f32 %v488, %v489
    %v491 = vsub.f32 1.0, %v490
    %v492 = vmul.f32 %v489, %v491
    %v493 = vadd.f32 %v489, %v492
    %vm494 = vweird.f32 %v488
    %vm495 = vweird.f32 %v489
    %vm496 = vmor %vm494, %vm495
    %v497 = vsel %vm496, %v489, %v493
    %v498 = vand.u32 2147483647, %v488
    %vm499 = vcmp.eq.f32.partialorder %v498, 8.507059e+37
    %v500 = vand.u32 %v488, 2147483648
    %v501 = vor.u32 1.1754944e-38, %v500
    %v502 = vsel %vm499, %v501, %v497
    %v503 = vmul.f32 1.0, %v502
    %v504 = vtanh.pop %v484
    %v505 = vmul.f32 %v503, %v441
    %507 = vrot.lane.b32.xlu0 %v504, 64
    %v508 = vpop.permute.xlu0 %507
    %v510 = vmul.f32 %v503, %v508
    %512 = vrot.lane.b32.xlu0 %v510, 32
    %v513 = vpop.permute.xlu0 %512
    %v515 = vadd.f32 %v505, %v513
    %v516 = vtanh.pop %v515
    %518 = vrot.lane.b32.xlu0 %v516, 64
    %v519 = vpop.permute.xlu0 %518
    %v521 = vmul.f32 %v503, %v519
    %v522 = vmax.f32 %v521, 0.0
    %524 = vrot.lane.b32.xlu0 %v522, 32
    %v525 = vpop.permute.xlu0 %524
    %527 = vst.msk [vmem:[#allocation2 + $0x8] sm:$0x3] %vm231, %v525
    %v528 = vrot.slane %v154, 5
    %v530 = vrot.slane %v157, 4
    %v532 = vsel %vm162, %v528, %v530
    %534 = vrot.lane.b32.xlu0 %v521, 32
    %v535 = vpop.permute.xlu0 %534
    %v536 = vsel %vm164, %v535, 0
    %538 = vmatpush.msra.mxu0 0.0
    %539 = vmatpush.msra.mxu0 0.0
    %540 = vmatpush.msra.mxu0 0.0
    %541 = vmatpush.msra.mxu0 0.0
    %542 = vmatpush.msra.mxu0 0.0
    %543 = vmatpush.msra.mxu0 0.0
    %544 = vmatpush.msra.mxu0 0.0
    %545 = vmatpush.msra.mxu0 0.0
    %546 = vmatpush.msra.mxu0 0.0
    %547 = vmatpush.msra.mxu0 0.0
    %548 = vmatpush.msra.mxu0 0.0
    %549 = vmatpush.msra.mxu0 0.0
    %550 = vmatpush.msra.mxu0 %v122
    %551 = vmatpush.msra.mxu0 %v121
    %552 = vmatpush.msra.mxu0 %v120
    %553 = vmatpush.msra.mxu0 %v119
    %554 = vmatmul.f32.gmra.mxu0 %v536
    %v555 = vpop.f32.mrf.mxu0
    %v556 = vadd.f32 0.0, %v555
    %557 = vdwg.mxu0
    %v558 = vadd.f32 %v532, %v556
    %v559 = vxor.u32 %v558, 2147483648
    %v560 = vmul.f32 %v559, 1.442695
    %v561 = vpow.pop %v560
    %v562 = vadd.f32 %v561, 1.0
    %v563 = vrcp.pop %v562
    %v564 = vmul.f32 %v562, %v563
    %v565 = vsub.f32 1.0, %v564
    %v566 = vmul.f32 %v563, %v565
    %v567 = vadd.f32 %v563, %v566
    %vm568 = vweird.f32 %v562
    %vm569 = vweird.f32 %v563
    %vm570 = vmor %vm568, %vm569
    %v571 = vsel %vm570, %v563, %v567
    %v572 = vand.u32 2147483647, %v562
    %vm573 = vcmp.eq.f32.partialorder %v572, 8.507059e+37
    %v574 = vand.u32 %v562, 2147483648
    %v575 = vor.u32 1.1754944e-38, %v574
    %v576 = vsel %vm573, %v575, %v571
    %v577 = vmul.f32 1.0, %v576
    %v578 = vtanh.pop %v558
    %v579 = vmul.f32 %v577, %v515
    %581 = vrot.lane.b32.xlu0 %v578, 64
    %v582 = vpop.permute.xlu0 %581
    %v584 = vmul.f32 %v577, %v582
    %586 = vrot.lane.b32.xlu0 %v584, 32
    %v587 = vpop.permute.xlu0 %586
    %v589 = vadd.f32 %v579, %v587
    %v590 = vtanh.pop %v589
    %592 = vrot.lane.b32.xlu0 %v590, 64
    %v593 = vpop.permute.xlu0 %592
    %v595 = vmul.f32 %v577, %v593
    %v596 = vmax.f32 %v595, 0.0
    %598 = vrot.lane.b32.xlu0 %v596, 32
    %v599 = vpop.permute.xlu0 %598
    %601 = vst.msk [vmem:[#allocation2 + $0xa] sm:$0x3] %vm231, %v599
    %v602 = vrot.slane %v154, 6
    %v604 = vrot.slane %v157, 5
    %v606 = vsel %vm162, %v602, %v604
    %608 = vrot.lane.b32.xlu0 %v595, 32
    %v609 = vpop.permute.xlu0 %608
    %v610 = vsel %vm164, %v609, 0
    %612 = vmatpush.msra.mxu0 0.0
    %613 = vmatpush.msra.mxu0 0.0
    %614 = vmatpush.msra.mxu0 0.0
    %615 = vmatpush.msra.mxu0 0.0
    %616 = vmatpush.msra.mxu0 0.0
    %617 = vmatpush.msra.mxu0 0.0
    %618 = vmatpush.msra.mxu0 0.0
    %619 = vmatpush.msra.mxu0 0.0
    %620 = vmatpush.msra.mxu0 0.0
    %621 = vmatpush.msra.mxu0 0.0
    %622 = vmatpush.msra.mxu0 0.0
    %623 = vmatpush.msra.mxu0 0.0
    %624 = vmatpush.msra.mxu0 %v122
    %625 = vmatpush.msra.mxu0 %v121
    %626 = vmatpush.msra.mxu0 %v120
    %627 = vmatpush.msra.mxu0 %v119
    %628 = vmatmul.f32.gmra.mxu0 %v610
    %v629 = vpop.f32.mrf.mxu0
    %v630 = vadd.f32 0.0, %v629
    %631 = vdwg.mxu0
    %v632 = vadd.f32 %v606, %v630
    %v633 = vxor.u32 %v632, 2147483648
    %v634 = vmul.f32 %v633, 1.442695
    %v635 = vpow.pop %v634
    %v636 = vadd.f32 %v635, 1.0
    %v637 = vrcp.pop %v636
    %v638 = vmul.f32 %v636, %v637
    %v639 = vsub.f32 1.0, %v638
    %v640 = vmul.f32 %v637, %v639
    %v641 = vadd.f32 %v637, %v640
    %vm642 = vweird.f32 %v636
    %vm643 = vweird.f32 %v637
    %vm644 = vmor %vm642, %vm643
    %v645 = vsel %vm644, %v637, %v641
    %v646 = vand.u32 2147483647, %v636
    %vm647 = vcmp.eq.f32.partialorder %v646, 8.507059e+37
    %v648 = vand.u32 %v636, 2147483648
    %v649 = vor.u32 1.1754944e-38, %v648
    %v650 = vsel %vm647, %v649, %v645
    %v651 = vmul.f32 1.0, %v650
    %v652 = vtanh.pop %v632
    %v653 = vmul.f32 %v651, %v589
    %655 = vrot.lane.b32.xlu0 %v652, 64
    %v656 = vpop.permute.xlu0 %655
    %v658 = vmul.f32 %v651, %v656
    %660 = vrot.lane.b32.xlu0 %v658, 32
    %v661 = vpop.permute.xlu0 %660
    %v663 = vadd.f32 %v653, %v661
    %v664 = vtanh.pop %v663
    %666 = vrot.lane.b32.xlu0 %v664, 64
    %v667 = vpop.permute.xlu0 %666
    %v669 = vmul.f32 %v651, %v667
    %v670 = vmax.f32 %v669, 0.0
    %672 = vrot.lane.b32.xlu0 %v670, 32
    %v673 = vpop.permute.xlu0 %672
    %675 = vst.msk [vmem:[#allocation2 + $0xc] sm:$0x3] %vm231, %v673
    %v676 = vrot.slane %v154, 7
    %v678 = vrot.slane %v157, 6
    %v680 = vsel %vm162, %v676, %v678
    %682 = vrot.lane.b32.xlu0 %v669, 32
    %v683 = vpop.permute.xlu0 %682
    %v684 = vsel %vm164, %v683, 0
    %686 = vmatpush.msra.mxu0 0.0
    %687 = vmatpush.msra.mxu0 0.0
    %688 = vmatpush.msra.mxu0 0.0
    %689 = vmatpush.msra.mxu0 0.0
    %690 = vmatpush.msra.mxu0 0.0
    %691 = vmatpush.msra.mxu0 0.0
    %692 = vmatpush.msra.mxu0 0.0
    %693 = vmatpush.msra.mxu0 0.0
    %694 = vmatpush.msra.mxu0 0.0
    %695 = vmatpush.msra.mxu0 0.0
    %696 = vmatpush.msra.mxu0 0.0
    %697 = vmatpush.msra.mxu0 0.0
    %698 = vmatpush.msra.mxu0 %v122
    %699 = vmatpush.msra.mxu0 %v121
    %700 = vmatpush.msra.mxu0 %v120
    %701 = vmatpush.msra.mxu0 %v119
    %702 = vmatmul.f32.gmra.mxu0 %v684
    %v703 = vpop.f32.mrf.mxu0
    %v704 = vadd.f32 0.0, %v703
    %705 = vdwg.mxu0
    %v706 = vadd.f32 %v680, %v704
    %v707 = vxor.u32 %v706, 2147483648
    %v708 = vmul.f32 %v707, 1.442695
    %v709 = vpow.pop %v708
    %v710 = vadd.f32 %v709, 1.0
    %v711 = vrcp.pop %v710
    %v712 = vmul.f32 %v710, %v711
    %v713 = vsub.f32 1.0, %v712
    %v714 = vmul.f32 %v711, %v713
    %v715 = vadd.f32 %v711, %v714
    %vm716 = vweird.f32 %v710
    %vm717 = vweird.f32 %v711
    %vm718 = vmor %vm716, %vm717
    %v719 = vsel %vm718, %v711, %v715
    %v720 = vand.u32 2147483647, %v710
    %vm721 = vcmp.eq.f32.partialorder %v720, 8.507059e+37
    %v722 = vand.u32 %v710, 2147483648
    %v723 = vor.u32 1.1754944e-38, %v722
    %v724 = vsel %vm721, %v723, %v719
    %v725 = vmul.f32 1.0, %v724
    %v726 = vtanh.pop %v706
    %v727 = vmul.f32 %v725, %v663
    %729 = vrot.lane.b32.xlu0 %v726, 64
    %v730 = vpop.permute.xlu0 %729
    %v732 = vmul.f32 %v725, %v730
    %734 = vrot.lane.b32.xlu0 %v732, 32
    %v735 = vpop.permute.xlu0 %734
    %v737 = vadd.f32 %v727, %v735
    %v738 = vtanh.pop %v737
    %740 = vrot.lane.b32.xlu0 %v738, 64
    %v741 = vpop.permute.xlu0 %740
    %v743 = vmul.f32 %v725, %v741
    %v744 = vmax.f32 %v743, 0.0
    %746 = vrot.lane.b32.xlu0 %v744, 32
    %v747 = vpop.permute.xlu0 %746
    %749 = vst.msk [vmem:[#allocation2 + $0xe] sm:$0x3] %vm231, %v747
    %v750 = vld [vmem:[#allocation8] sm:$0xff]
    %v751 = vld [vmem:[#allocation8 + $0x8] sm:$0xff]
    %v752 = vld [vmem:[#allocation8 + $0x10] sm:$0xff]
    %v753 = vld [vmem:[#allocation8 + $0x18] sm:$0xff]
    %v754 = vld [vmem:[#allocation9] sm:$0xff]
    %v755 = vld [vmem:[#allocation9 + $0x8] sm:$0xff]
    %v756 = vld [vmem:[#allocation9 + $0x10] sm:$0xff]
    %v757 = vld [vmem:[#allocation9 + $0x18] sm:$0xff]
    %v758 = vld [vmem:[%s6] sm:$0x1]
    %v759 = vld [vmem:[#allocation2] sm:$0xff]
    %v760 = vld [vmem:[#allocation2 + $0x8] sm:$0xff]
    %v762 = vperm.slane %v758, 0
    %v765 = vsel %vm164, %v759, 0
    %v768 = vsel %vm164, %v760, 0
    %770 = vmatpush.msra.mxu0 0.0
    %771 = vmatpush.msra.mxu0 0.0
    %772 = vmatpush.msra.mxu0 0.0
    %773 = vmatpush.msra.mxu0 0.0
    %774 = vmatpush.msra.mxu0 0.0
    %775 = vmatpush.msra.mxu0 0.0
    %776 = vmatpush.msra.mxu0 0.0
    %777 = vmatpush.msra.mxu0 0.0
    %778 = vmatpush.msra.mxu0 0.0
    %779 = vmatpush.msra.mxu0 0.0
    %780 = vmatpush.msra.mxu0 0.0
    %781 = vmatpush.msra.mxu0 0.0
    %782 = vmatpush.msra.mxu0 %v753
    %783 = vmatpush.msra.mxu0 %v752
    %784 = vmatpush.msra.mxu0 %v751
    %785 = vmatpush.msra.mxu0 %v750
    %786 = vmatmul.f32.gmra.mxu0 %v765
    %v787 = vpop.f32.mrf.mxu0
    %v788 = vadd.f32 %v762, %v787
    %789 = vmatmul.f32.gmra.mxu0 %v768
    %v790 = vpop.f32.mrf.mxu0
    %v791 = vadd.f32 %v762, %v790
    %792 = vdwg.mxu0
    %793 = vmatpush.msra.mxu0 0.0
    %794 = vmatpush.msra.mxu0 0.0
    %795 = vmatpush.msra.mxu0 0.0
    %796 = vmatpush.msra.mxu0 0.0
    %797 = vmatpush.msra.mxu0 0.0
    %798 = vmatpush.msra.mxu0 0.0
    %799 = vmatpush.msra.mxu0 0.0
    %800 = vmatpush.msra.mxu0 0.0
    %801 = vmatpush.msra.mxu0 0.0
    %802 = vmatpush.msra.mxu0 0.0
    %803 = vmatpush.msra.mxu0 0.0
    %804 = vmatpush.msra.mxu0 0.0
    %805 = vmatpush.msra.mxu0 %v757
    %806 = vmatpush.msra.mxu0 %v756
    %807 = vmatpush.msra.mxu0 %v755
    %808 = vmatpush.msra.mxu0 %v754
    %809 = vmatmul.f32.gmra.mxu0 %v166
    %v810 = vpop.f32.mrf.mxu0
    %v811 = vadd.f32 0.0, %v810
    %812 = vdwg.mxu0
    %v813 = vadd.f32 %v788, %v811
    %v814 = vxor.u32 %v813, 2147483648
    %v815 = vmul.f32 %v814, 1.442695
    %v816 = vpow.pop %v815
    %v817 = vadd.f32 %v816, 1.0
    %v818 = vrcp.pop %v817
    %v819 = vmul.f32 %v817, %v818
    %v820 = vsub.f32 1.0, %v819
    %v821 = vmul.f32 %v818, %v820
    %v822 = vadd.f32 %v818, %v821
    %vm823 = vweird.f32 %v817
    %vm824 = vweird.f32 %v818
    %vm825 = vmor %vm823, %vm824
    %v826 = vsel %vm825, %v818, %v822
    %v827 = vand.u32 2147483647, %v817
    %vm828 = vcmp.eq.f32.partialorder %v827, 8.507059e+37
    %v829 = vand.u32 %v817, 2147483648
    %v830 = vor.u32 1.1754944e-38, %v829
    %v831 = vsel %vm828, %v830, %v826
    %v832 = vmul.f32 1.0, %v831
    %v833 = vtanh.pop %v813
    %v834 = vmul.f32 %v832, 0.0
    %836 = vrot.lane.b32.xlu0 %v833, 64
    %v837 = vpop.permute.xlu0 %836
    %v839 = vmul.f32 %v832, %v837
    %841 = vrot.lane.b32.xlu0 %v839, 32
    %v842 = vpop.permute.xlu0 %841
    %v844 = vadd.f32 %v834, %v842
    %v845 = vtanh.pop %v844
    %847 = vrot.lane.b32.xlu0 %v845, 64
    %v848 = vpop.permute.xlu0 %847
    %v850 = vmul.f32 %v832, %v848
    %852 = vrot.lane.b32.xlu0 %v850, 32
    %v853 = vpop.permute.xlu0 %852
    %v854 = vsel %vm164, %v853, 0
    %856 = vmatpush.msra.mxu0 0.0
    %857 = vmatpush.msra.mxu0 0.0
    %858 = vmatpush.msra.mxu0 0.0
    %859 = vmatpush.msra.mxu0 0.0
    %860 = vmatpush.msra.mxu0 0.0
    %861 = vmatpush.msra.mxu0 0.0
    %862 = vmatpush.msra.mxu0 0.0
    %863 = vmatpush.msra.mxu0 0.0
    %864 = vmatpush.msra.mxu0 0.0
    %865 = vmatpush.msra.mxu0 0.0
    %866 = vmatpush.msra.mxu0 0.0
    %867 = vmatpush.msra.mxu0 0.0
    %868 = vmatpush.msra.mxu0 %v757
    %869 = vmatpush.msra.mxu0 %v756
    %870 = vmatpush.msra.mxu0 %v755
    %871 = vmatpush.msra.mxu0 %v754
    %872 = vmatmul.f32.gmra.mxu0 %v854
    %v873 = vpop.f32.mrf.mxu0
    %v874 = vadd.f32 0.0, %v873
    %875 = vdwg.mxu0
    %v877 = vrot.slane %v874, 6
    %v879 = vadd.f32 %v788, %v877
    %v880 = vxor.u32 %v879, 2147483648
    %v881 = vmul.f32 %v880, 1.442695
    %v882 = vpow.pop %v881
    %v883 = vadd.f32 %v882, 1.0
    %v884 = vrcp.pop %v883
    %v885 = vmul.f32 %v883, %v884
    %v886 = vsub.f32 1.0, %v885
    %v887 = vmul.f32 %v884, %v886
    %v888 = vadd.f32 %v884, %v887
    %vm889 = vweird.f32 %v883
    %vm890 = vweird.f32 %v884
    %vm891 = vmor %vm889, %vm890
    %v892 = vsel %vm891, %v884, %v888
    %v893 = vand.u32 2147483647, %v883
    %vm894 = vcmp.eq.f32.partialorder %v893, 8.507059e+37
    %v895 = vand.u32 %v883, 2147483648
    %v896 = vor.u32 1.1754944e-38, %v895
    %v897 = vsel %vm894, %v896, %v892
    %v898 = vmul.f32 1.0, %v897
    %v899 = vtanh.pop %v879
    %v901 = vrot.slane %v844, 6
    %v903 = vmul.f32 %v898, %v901
    %905 = vrot.lane.b32.xlu0 %v899, 64
    %v906 = vpop.permute.xlu0 %905
    %v908 = vmul.f32 %v898, %v906
    %910 = vrot.lane.b32.xlu0 %v908, 32
    %v911 = vpop.permute.xlu0 %910
    %v913 = vadd.f32 %v903, %v911
    %v914 = vtanh.pop %v913
    %916 = vrot.lane.b32.xlu0 %v914, 64
    %v917 = vpop.permute.xlu0 %916
    %v919 = vmul.f32 %v898, %v917
    %v921 = vrot.slane %v919, 2
    %922 = vrot.lane.b32.xlu0 %v921, 32
    %v923 = vpop.permute.xlu0 %922
    %v924 = vsel %vm164, %v923, 0
    %926 = vmatpush.msra.mxu0 0.0
    %927 = vmatpush.msra.mxu0 0.0
    %928 = vmatpush.msra.mxu0 0.0
    %929 = vmatpush.msra.mxu0 0.0
    %930 = vmatpush.msra.mxu0 0.0
    %931 = vmatpush.msra.mxu0 0.0
    %932 = vmatpush.msra.mxu0 0.0
    %933 = vmatpush.msra.mxu0 0.0
    %934 = vmatpush.msra.mxu0 0.0
    %935 = vmatpush.msra.mxu0 0.0
    %936 = vmatpush.msra.mxu0 0.0
    %937 = vmatpush.msra.mxu0 0.0
    %938 = vmatpush.msra.mxu0 %v757
    %939 = vmatpush.msra.mxu0 %v756
    %940 = vmatpush.msra.mxu0 %v755
    %941 = vmatpush.msra.mxu0 %v754
    %942 = vmatmul.f32.gmra.mxu0 %v924
    %v943 = vpop.f32.mrf.mxu0
    %v944 = vadd.f32 0.0, %v943
    %945 = vdwg.mxu0
    %v947 = vrot.slane %v944, 4
    %v949 = vadd.f32 %v788, %v947
    %v950 = vxor.u32 %v949, 2147483648
    %v951 = vmul.f32 %v950, 1.442695
    %v952 = vpow.pop %v951
    %v953 = vadd.f32 %v952, 1.0
    %v954 = vrcp.pop %v953
    %v955 = vmul.f32 %v953, %v954
    %v956 = vsub.f32 1.0, %v955
    %v957 = vmul.f32 %v954, %v956
    %v958 = vadd.f32 %v954, %v957
    %vm959 = vweird.f32 %v953
    %vm960 = vweird.f32 %v954
    %vm961 = vmor %vm959, %vm960
    %v962 = vsel %vm961, %v954, %v958
    %v963 = vand.u32 2147483647, %v953
    %vm964 = vcmp.eq.f32.partialorder %v963, 8.507059e+37
    %v965 = vand.u32 %v953, 2147483648
    %v966 = vor.u32 1.1754944e-38, %v965
    %v967 = vsel %vm964, %v966, %v962
    %v968 = vmul.f32 1.0, %v967
    %v969 = vtanh.pop %v949
    %v971 = vrot.slane %v913, 6
    %v973 = vmul.f32 %v968, %v971
    %975 = vrot.lane.b32.xlu0 %v969, 64
    %v976 = vpop.permute.xlu0 %975
    %v978 = vmul.f32 %v968, %v976
    %980 = vrot.lane.b32.xlu0 %v978, 32
    %v981 = vpop.permute.xlu0 %980
    %v983 = vadd.f32 %v973, %v981
    %v984 = vtanh.pop %v983
    %986 = vrot.lane.b32.xlu0 %v984, 64
    %v987 = vpop.permute.xlu0 %986
    %v989 = vmul.f32 %v968, %v987
    %v991 = vrot.slane %v989, 4
    %992 = vrot.lane.b32.xlu0 %v991, 32
    %v993 = vpop.permute.xlu0 %992
    %v994 = vsel %vm164, %v993, 0
    %996 = vmatpush.msra.mxu0 0.0
    %997 = vmatpush.msra.mxu0 0.0
    %998 = vmatpush.msra.mxu0 0.0
    %999 = vmatpush.msra.mxu0 0.0
    %1000 = vmatpush.msra.mxu0 0.0
    %1001 = vmatpush.msra.mxu0 0.0
    %1002 = vmatpush.msra.mxu0 0.0
    %1003 = vmatpush.msra.mxu0 0.0
    %1004 = vmatpush.msra.mxu0 0.0
    %1005 = vmatpush.msra.mxu0 0.0
    %1006 = vmatpush.msra.mxu0 0.0
    %1007 = vmatpush.msra.mxu0 0.0
    %1008 = vmatpush.msra.mxu0 %v757
    %1009 = vmatpush.msra.mxu0 %v756
    %1010 = vmatpush.msra.mxu0 %v755
    %1011 = vmatpush.msra.mxu0 %v754
    %1012 = vmatmul.f32.gmra.mxu0 %v994
    %v1013 = vpop.f32.mrf.mxu0
    %v1014 = vadd.f32 0.0, %v1013
    %1015 = vdwg.mxu0
    %v1017 = vrot.slane %v1014, 2
    %v1019 = vadd.f32 %v788, %v1017
    %v1020 = vxor.u32 %v1019, 2147483648
    %v1021 = vmul.f32 %v1020, 1.442695
    %v1022 = vpow.pop %v1021
    %v1023 = vadd.f32 %v1022, 1.0
    %v1024 = vrcp.pop %v1023
    %v1025 = vmul.f32 %v1023, %v1024
    %v1026 = vsub.f32 1.0, %v1025
    %v1027 = vmul.f32 %v1024, %v1026
    %v1028 = vadd.f32 %v1024, %v1027
    %vm1029 = vweird.f32 %v1023
    %vm1030 = vweird.f32 %v1024
    %vm1031 = vmor %vm1029, %vm1030
    %v1032 = vsel %vm1031, %v1024, %v1028
    %v1033 = vand.u32 2147483647, %v1023
    %vm1034 = vcmp.eq.f32.partialorder %v1033, 8.507059e+37
    %v1035 = vand.u32 %v1023, 2147483648
    %v1036 = vor.u32 1.1754944e-38, %v1035
    %v1037 = vsel %vm1034, %v1036, %v1032
    %v1038 = vmul.f32 1.0, %v1037
    %v1039 = vtanh.pop %v1019
    %v1041 = vrot.slane %v983, 6
    %v1043 = vmul.f32 %v1038, %v1041
    %1045 = vrot.lane.b32.xlu0 %v1039, 64
    %v1046 = vpop.permute.xlu0 %1045
    %v1048 = vmul.f32 %v1038, %v1046
    %1050 = vrot.lane.b32.xlu0 %v1048, 32
    %v1051 = vpop.permute.xlu0 %1050
    %v1053 = vadd.f32 %v1043, %v1051
    %v1054 = vtanh.pop %v1053
    %1056 = vrot.lane.b32.xlu0 %v1054, 64
    %v1057 = vpop.permute.xlu0 %1056
    %v1059 = vmul.f32 %v1038, %v1057
    %v1061 = vrot.slane %v1059, 6
    %1062 = vrot.lane.b32.xlu0 %v1061, 32
    %v1063 = vpop.permute.xlu0 %1062
    %v1064 = vsel %vm164, %v1063, 0
    %1066 = vmatpush.msra.mxu0 0.0
    %1067 = vmatpush.msra.mxu0 0.0
    %1068 = vmatpush.msra.mxu0 0.0
    %1069 = vmatpush.msra.mxu0 0.0
    %1070 = vmatpush.msra.mxu0 0.0
    %1071 = vmatpush.msra.mxu0 0.0
    %1072 = vmatpush.msra.mxu0 0.0
    %1073 = vmatpush.msra.mxu0 0.0
    %1074 = vmatpush.msra.mxu0 0.0
    %1075 = vmatpush.msra.mxu0 0.0
    %1076 = vmatpush.msra.mxu0 0.0
    %1077 = vmatpush.msra.mxu0 0.0
    %1078 = vmatpush.msra.mxu0 %v757
    %1079 = vmatpush.msra.mxu0 %v756
    %1080 = vmatpush.msra.mxu0 %v755
    %1081 = vmatpush.msra.mxu0 %v754
    %1082 = vmatmul.f32.gmra.mxu0 %v1064
    %v1083 = vpop.f32.mrf.mxu0
    %v1084 = vadd.f32 0.0, %v1083
    %1085 = vdwg.mxu0
    %v1086 = vadd.f32 %v791, %v1084
    %v1087 = vxor.u32 %v1086, 2147483648
    %v1088 = vmul.f32 %v1087, 1.442695
    %v1089 = vpow.pop %v1088
    %v1090 = vadd.f32 %v1089, 1.0
    %v1091 = vrcp.pop %v1090
    %v1092 = vmul.f32 %v1090, %v1091
    %v1093 = vsub.f32 1.0, %v1092
    %v1094 = vmul.f32 %v1091, %v1093
    %v1095 = vadd.f32 %v1091, %v1094
    %vm1096 = vweird.f32 %v1090
    %vm1097 = vweird.f32 %v1091
    %vm1098 = vmor %vm1096, %vm1097
    %v1099 = vsel %vm1098, %v1091, %v1095
    %v1100 = vand.u32 2147483647, %v1090
    %vm1101 = vcmp.eq.f32.partialorder %v1100, 8.507059e+37
    %v1102 = vand.u32 %v1090, 2147483648
    %v1103 = vor.u32 1.1754944e-38, %v1102
    %v1104 = vsel %vm1101, %v1103, %v1099
    %v1105 = vmul.f32 1.0, %v1104
    %v1106 = vtanh.pop %v1086
    %v1108 = vrot.slane %v1053, 6
    %v1110 = vmul.f32 %v1105, %v1108
    %1112 = vrot.lane.b32.xlu0 %v1106, 64
    %v1113 = vpop.permute.xlu0 %1112
    %v1115 = vmul.f32 %v1105, %v1113
    %1117 = vrot.lane.b32.xlu0 %v1115, 32
    %v1118 = vpop.permute.xlu0 %1117
    %v1120 = vadd.f32 %v1110, %v1118
    %v1121 = vtanh.pop %v1120
    %1123 = vrot.lane.b32.xlu0 %v1121, 64
    %v1124 = vpop.permute.xlu0 %1123
    %v1126 = vmul.f32 %v1105, %v1124
    %1128 = vrot.lane.b32.xlu0 %v1126, 32
    %v1129 = vpop.permute.xlu0 %1128
    %v1130 = vsel %vm164, %v1129, 0
    %1132 = vmatpush.msra.mxu0 0.0
    %1133 = vmatpush.msra.mxu0 0.0
    %1134 = vmatpush.msra.mxu0 0.0
    %1135 = vmatpush.msra.mxu0 0.0
    %1136 = vmatpush.msra.mxu0 0.0
    %1137 = vmatpush.msra.mxu0 0.0
    %1138 = vmatpush.msra.mxu0 0.0
    %1139 = vmatpush.msra.mxu0 0.0
    %1140 = vmatpush.msra.mxu0 0.0
    %1141 = vmatpush.msra.mxu0 0.0
    %1142 = vmatpush.msra.mxu0 0.0
    %1143 = vmatpush.msra.mxu0 0.0
    %1144 = vmatpush.msra.mxu0 %v757
    %1145 = vmatpush.msra.mxu0 %v756
    %1146 = vmatpush.msra.mxu0 %v755
    %1147 = vmatpush.msra.mxu0 %v754
    %1148 = vmatmul.f32.gmra.mxu0 %v1130
    %v1149 = vpop.f32.mrf.mxu0
    %v1150 = vadd.f32 0.0, %v1149
    %1151 = vdwg.mxu0
    %v1153 = vrot.slane %v1150, 6
    %v1155 = vadd.f32 %v791, %v1153
    %v1156 = vxor.u32 %v1155, 2147483648
    %v1157 = vmul.f32 %v1156, 1.442695
    %v1158 = vpow.pop %v1157
    %v1159 = vadd.f32 %v1158, 1.0
    %v1160 = vrcp.pop %v1159
    %v1161 = vmul.f32 %v1159, %v1160
    %v1162 = vsub.f32 1.0, %v1161
    %v1163 = vmul.f32 %v1160, %v1162
    %v1164 = vadd.f32 %v1160, %v1163
    %vm1165 = vweird.f32 %v1159
    %vm1166 = vweird.f32 %v1160
    %vm1167 = vmor %vm1165, %vm1166
    %v1168 = vsel %vm1167, %v1160, %v1164
    %v1169 = vand.u32 2147483647, %v1159
    %vm1170 = vcmp.eq.f32.partialorder %v1169, 8.507059e+37
    %v1171 = vand.u32 %v1159, 2147483648
    %v1172 = vor.u32 1.1754944e-38, %v1171
    %v1173 = vsel %vm1170, %v1172, %v1168
    %v1174 = vmul.f32 1.0, %v1173
    %v1175 = vtanh.pop %v1155
    %v1177 = vrot.slane %v1120, 6
    %v1179 = vmul.f32 %v1174, %v1177
    %1181 = vrot.lane.b32.xlu0 %v1175, 64
    %v1182 = vpop.permute.xlu0 %1181
    %v1184 = vmul.f32 %v1174, %v1182
    %1186 = vrot.lane.b32.xlu0 %v1184, 32
    %v1187 = vpop.permute.xlu0 %1186
    %v1189 = vadd.f32 %v1179, %v1187
    %v1190 = vtanh.pop %v1189
    %1192 = vrot.lane.b32.xlu0 %v1190, 64
    %v1193 = vpop.permute.xlu0 %1192
    %v1195 = vmul.f32 %v1174, %v1193
    %v1197 = vrot.slane %v1195, 2
    %1198 = vrot.lane.b32.xlu0 %v1197, 32
    %v1199 = vpop.permute.xlu0 %1198
    %v1200 = vsel %vm164, %v1199, 0
    %1202 = vmatpush.msra.mxu0 0.0
    %1203 = vmatpush.msra.mxu0 0.0
    %1204 = vmatpush.msra.mxu0 0.0
    %1205 = vmatpush.msra.mxu0 0.0
    %1206 = vmatpush.msra.mxu0 0.0
    %1207 = vmatpush.msra.mxu0 0.0
    %1208 = vmatpush.msra.mxu0 0.0
    %1209 = vmatpush.msra.mxu0 0.0
    %1210 = vmatpush.msra.mxu0 0.0
    %1211 = vmatpush.msra.mxu0 0.0
    %1212 = vmatpush.msra.mxu0 0.0
    %1213 = vmatpush.msra.mxu0 0.0
    %1214 = vmatpush.msra.mxu0 %v757
    %1215 = vmatpush.msra.mxu0 %v756
    %1216 = vmatpush.msra.mxu0 %v755
    %1217 = vmatpush.msra.mxu0 %v754
    %1218 = vmatmul.f32.gmra.mxu0 %v1200
    %v1219 = vpop.f32.mrf.mxu0
    %v1220 = vadd.f32 0.0, %v1219
    %1221 = vdwg.mxu0
    %v1223 = vrot.slane %v1220, 4
    %v1225 = vadd.f32 %v791, %v1223
    %v1226 = vxor.u32 %v1225, 2147483648
    %v1227 = vmul.f32 %v1226, 1.442695
    %v1228 = vpow.pop %v1227
    %v1229 = vadd.f32 %v1228, 1.0
    %v1230 = vrcp.pop %v1229
    %v1231 = vmul.f32 %v1229, %v1230
    %v1232 = vsub.f32 1.0, %v1231
    %v1233 = vmul.f32 %v1230, %v1232
    %v1234 = vadd.f32 %v1230, %v1233
    %vm1235 = vweird.f32 %v1229
    %vm1236 = vweird.f32 %v1230
    %vm1237 = vmor %vm1235, %vm1236
    %v1238 = vsel %vm1237, %v1230, %v1234
    %v1239 = vand.u32 2147483647, %v1229
    %vm1240 = vcmp.eq.f32.partialorder %v1239, 8.507059e+37
    %v1241 = vand.u32 %v1229, 2147483648
    %v1242 = vor.u32 1.1754944e-38, %v1241
    %v1243 = vsel %vm1240, %v1242, %v1238
    %v1244 = vmul.f32 1.0, %v1243
    %v1245 = vtanh.pop %v1225
    %v1247 = vrot.slane %v1189, 6
    %v1249 = vmul.f32 %v1244, %v1247
    %1251 = vrot.lane.b32.xlu0 %v1245, 64
    %v1252 = vpop.permute.xlu0 %1251
    %v1254 = vmul.f32 %v1244, %v1252
    %1256 = vrot.lane.b32.xlu0 %v1254, 32
    %v1257 = vpop.permute.xlu0 %1256
    %v1259 = vadd.f32 %v1249, %v1257
    %v1260 = vtanh.pop %v1259
    %1262 = vrot.lane.b32.xlu0 %v1260, 64
    %v1263 = vpop.permute.xlu0 %1262
    %v1265 = vmul.f32 %v1244, %v1263
    %v1267 = vrot.slane %v1265, 4
    %1268 = vrot.lane.b32.xlu0 %v1267, 32
    %v1269 = vpop.permute.xlu0 %1268
    %v1270 = vsel %vm164, %v1269, 0
    %1272 = vmatpush.msra.mxu0 0.0
    %1273 = vmatpush.msra.mxu0 0.0
    %1274 = vmatpush.msra.mxu0 0.0
    %1275 = vmatpush.msra.mxu0 0.0
    %1276 = vmatpush.msra.mxu0 0.0
    %1277 = vmatpush.msra.mxu0 0.0
    %1278 = vmatpush.msra.mxu0 0.0
    %1279 = vmatpush.msra.mxu0 0.0
    %1280 = vmatpush.msra.mxu0 0.0
    %1281 = vmatpush.msra.mxu0 0.0
    %1282 = vmatpush.msra.mxu0 0.0
    %1283 = vmatpush.msra.mxu0 0.0
    %1284 = vmatpush.msra.mxu0 %v757
    %1285 = vmatpush.msra.mxu0 %v756
    %1286 = vmatpush.msra.mxu0 %v755
    %1287 = vmatpush.msra.mxu0 %v754
    %1288 = vmatmul.f32.gmra.mxu0 %v1270
    %v1289 = vpop.f32.mrf.mxu0
    %v1290 = vadd.f32 0.0, %v1289
    %1291 = vdwg.mxu0
    %v1293 = vrot.slane %v1290, 2
    %v1295 = vadd.f32 %v791, %v1293
    %v1296 = vxor.u32 %v1295, 2147483648
    %v1297 = vmul.f32 %v1296, 1.442695
    %v1298 = vpow.pop %v1297
    %v1299 = vadd.f32 %v1298, 1.0
    %v1300 = vrcp.pop %v1299
    %v1301 = vmul.f32 %v1299, %v1300
    %v1302 = vsub.f32 1.0, %v1301
    %v1303 = vmul.f32 %v1300, %v1302
    %v1304 = vadd.f32 %v1300, %v1303
    %vm1305 = vweird.f32 %v1299
    %vm1306 = vweird.f32 %v1300
    %vm1307 = vmor %vm1305, %vm1306
    %v1308 = vsel %vm1307, %v1300, %v1304
    %v1309 = vand.u32 2147483647, %v1299
    %vm1310 = vcmp.eq.f32.partialorder %v1309, 8.507059e+37
    %v1311 = vand.u32 %v1299, 2147483648
    %v1312 = vor.u32 1.1754944e-38, %v1311
    %v1313 = vsel %vm1310, %v1312, %v1308
    %v1314 = vmul.f32 1.0, %v1313
    %v1315 = vtanh.pop %v1295
    %v1317 = vrot.slane %v1259, 6
    %v1319 = vmul.f32 %v1314, %v1317
    %1321 = vrot.lane.b32.xlu0 %v1315, 64
    %v1322 = vpop.permute.xlu0 %1321
    %v1324 = vmul.f32 %v1314, %v1322
    %1326 = vrot.lane.b32.xlu0 %v1324, 32
    %v1327 = vpop.permute.xlu0 %1326
    %v1329 = vadd.f32 %v1319, %v1327
    %v1330 = vtanh.pop %v1329
    %1332 = vrot.lane.b32.xlu0 %v1330, 64
    %v1333 = vpop.permute.xlu0 %1332
    %v1335 = vmul.f32 %v1314, %v1333
    %v1336 = vmax.f32 %v1335, 0.0
    %v1337 = vld [vmem:[#allocation11] sm:$0xff]
    %v1338 = vld [vmem:[#allocation11 + $0x8] sm:$0xff]
    %v1339 = vld [vmem:[#allocation11 + $0x10] sm:$0xff]
    %v1340 = vld [vmem:[#allocation11 + $0x18] sm:$0xff]
    %v1341 = vld [vmem:[%s8] sm:$0x1]
    %v1343 = vperm.slane %v1341, 0
    %v1346 = vrot.slane %v1336, 6
    %1347 = vrot.lane.b32.xlu0 %v1346, 32
    %v1348 = vpop.permute.xlu0 %1347
    %v1349 = vsel %vm164, %v1348, 0
    %1351 = vmatpush.msra.mxu0 0.0
    %1352 = vmatpush.msra.mxu0 0.0
    %1353 = vmatpush.msra.mxu0 0.0
    %1354 = vmatpush.msra.mxu0 0.0
    %1355 = vmatpush.msra.mxu0 0.0
    %1356 = vmatpush.msra.mxu0 0.0
    %1357 = vmatpush.msra.mxu0 0.0
    %1358 = vmatpush.msra.mxu0 0.0
    %1359 = vmatpush.msra.mxu0 0.0
    %1360 = vmatpush.msra.mxu0 0.0
    %1361 = vmatpush.msra.mxu0 0.0
    %1362 = vmatpush.msra.mxu0 0.0
    %1363 = vmatpush.msra.mxu0 %v1340
    %1364 = vmatpush.msra.mxu0 %v1339
    %1365 = vmatpush.msra.mxu0 %v1338
    %1366 = vmatpush.msra.mxu0 %v1337
    %1367 = vmatmul.f32.gmra.mxu0 %v1349
    %v1368 = vpop.f32.mrf.mxu0
    %v1369 = vadd.f32 %v1343, %v1368
    %1370 = vdwg.mxu0
    %v1371 = vmax.f32 %v1369, 0.0
    %v1372 = vld [vmem:[%s9] sm:$0xff]
    %v1373 = vld [vmem:[%s9 + $0x8] sm:$0xff]
    %v1374 = vld [vmem:[%s9 + $0x10] sm:$0xff]
    %v1375 = vld [vmem:[%s9 + $0x18] sm:$0xff]
    %v1376 = vld [vmem:[%s10] sm:$0x1]
    %v1378 = vperm.slane %v1376, 0
    %v1381 = vsel %vm164, %v1371, 0
    %1383 = vmatpush.msra.mxu0 0.0
    %1384 = vmatpush.msra.mxu0 0.0
    %1385 = vmatpush.msra.mxu0 0.0
    %1386 = vmatpush.msra.mxu0 0.0
    %1387 = vmatpush.msra.mxu0 0.0
    %1388 = vmatpush.msra.mxu0 0.0
    %1389 = vmatpush.msra.mxu0 0.0
    %1390 = vmatpush.msra.mxu0 0.0
    %1391 = vmatpush.msra.mxu0 0.0
    %1392 = vmatpush.msra.mxu0 0.0
    %1393 = vmatpush.msra.mxu0 0.0
    %1394 = vmatpush.msra.mxu0 0.0
    %1395 = vmatpush.msra.mxu0 %v1375
    %1396 = vmatpush.msra.mxu0 %v1374
    %1397 = vmatpush.msra.mxu0 %v1373
    %1398 = vmatpush.msra.mxu0 %v1372
    %1399 = vmatmul.f32.gmra.mxu0 %v1381
    %v1400 = vpop.f32.mrf.mxu0
    %v1401 = vadd.f32 %v1378, %v1400
    %1402 = vdwg.mxu0
    %v1403 = vmax.f32 %v1401, 0.0
    %vm1404 = vcmask 58368
    %1405 = vst.msk [vmem:[#allocation12] sm:$0x3] %vm1404, %v1403
    // Predicated region
    $region66: #{tpu_custom_call.1} parent=1 // pred_check
      _
    $region67: #{tpu_custom_call.1} parent=1 // pred_check_branch
      %1407 = sbr.rel (0) target = $region69
    $region68: #{tpu_custom_call.1} parent=1 // pred_region
      %1409 = vsyncadd [#allocation5], 0
      %s1411 = sshll.u32 [#allocation12], 4
      %s1412 = int_to_ptr.vmem [resolvable:$true] %s1411
      %s1413 = sshll.u32 %s11, 4
      %s1414 = int_to_ptr.hbm [resolvable:$true] %s1413
      %1416 = dma.vmem_to_hbm [thread:$0]  %s1412, 32, %s1414, [#allocation5]
    $region69: #{tpu_custom_call.1} parent=1 // pred_fallthru
      _
    // Predicated region
    $region70: #{tpu_custom_call.1} parent=1 // pred_check
      _
    $region71: #{tpu_custom_call.1} parent=1 // pred_check_branch
      %1418 = sbr.rel (0) target = $region73
    $region72: #{tpu_custom_call.1} parent=1 // pred_region
      %1420 = dma.done [#allocation5], 32
    $region73: #{tpu_custom_call.1} parent=1 // pred_fallthru
      _
    %1421 = vsyncpa [#allocation4], 1
    %1422 = vsyncpa [#allocation7], 1
    %1423 = vsyncpa [#allocation10], 1
    %1424 = vsyncpa [#allocation5], 1

</llo_original>
